<compile_context>
chip_gen: v7x
topology: tpu7x:2x2x1
jax: 0.10.0
libtpu: 0.0.40
codegen_flags: <defaults>
</compile_context>

<pallas_src>
import functools
import math

import jax
import jax.numpy as jnp
from jax.experimental import pallas as pl
from jax.experimental.pallas import tpu as pltpu


# ----------------------------------------------------------------------------
# Device introspection helpers
# ----------------------------------------------------------------------------
@functools.lru_cache(maxsize=None)
def _device_kind():
    try:
        return jax.devices()[0].device_kind.lower()
    except Exception:
        return ""


@functools.lru_cache(maxsize=None)
def _prefers_256_tile():
    # v6e / v7x have 256-wide MXUs; v5e (and older) prefer 128-wide output tiles.
    k = _device_kind()
    return ("v6" in k) or ("v7" in k)


@functools.lru_cache(maxsize=None)
def _vmem_cap_bytes():
    try:
        return int(pltpu.get_tpu_info().vmem_capacity_bytes)
    except Exception:
        pass
    return (64 << 20) if ("v7" in _device_kind()) else (128 << 20)


def _vmem_limit(need_bytes):
    cap = _vmem_cap_bytes()
    return int(min(cap * 3 // 4, max(int(need_bytes) + (8 << 20), 32 << 20)))


# ----------------------------------------------------------------------------
# In-kernel patch-matrix construction (shared by both paths)
# ----------------------------------------------------------------------------
def _patch_matrix(phase_refs, *, stride, ksize, n, ho, wo, cin):
    """Build the (M, ksize*ksize*Cin) bf16 im2col patch matrix in VMEM.

    Each (kh, kw) tap is a static slice of one phase-decomposed padded slab ref,
    so only the touched window is loaded; the taps are concatenated along K so a
    single MXU matmul (K = ksize*ksize*Cin) does the whole convolution.
    """
    m = n * ho * wo
    taps = []
    for kh in range(ksize):
        for kw in range(ksize):
            p = (kh % stride) * stride + (kw % stride)
            oh, ow = kh // stride, kw // stride
            win = phase_refs[p][:, oh:oh + ho, ow:ow + wo, :]      # (N, Ho, Wo, Cin) bf16
            taps.append(win.reshape(m, cin))
    if len(taps) == 1:
        return taps[0]
    return jnp.concatenate(taps, axis=-1)                          # (M, K) bf16


# ----------------------------------------------------------------------------
# Kernel 1: fully fused Conv + train-mode BN (+ReLU), full M resident
# ----------------------------------------------------------------------------
def _conv_bn_fused_kernel(*refs, stride, ksize, n, ho, wo, cin, relu, eps):
    """refs = (*phase_refs, w_ref, g_ref, b_ref, o_ref)

    phase_refs[p]: (N, Hp, Wp, Cin) bf16   phase-decomposed padded input slab
    w_ref        : (K, Ct)          bf16   taps-major HWIO weights (Cout tile)
    g_ref, b_ref : (1, Ct)          f32    BN gamma / beta
    o_ref        : (M, Ct)                 fused conv+BN(+ReLU) output
    """
    num_phases = stride * stride
    phase_refs = refs[:num_phases]
    w_ref, g_ref, b_ref, o_ref = refs[num_phases:]
    m = n * ho * wo

    patches = _patch_matrix(phase_refs, stride=stride, ksize=ksize,
                            n=n, ho=ho, wo=wo, cin=cin)
    # One big MXU matmul, f32 accumulation.
    acc = jnp.dot(patches, w_ref[...], preferred_element_type=jnp.float32)

    # Training-mode BN over the M rows: two-pass (centered) variance for accuracy.
    inv_m = 1.0 / m
    mean = jnp.sum(acc, axis=0, keepdims=True) * inv_m
    centered = acc - mean
    var = jnp.sum(centered * centered, axis=0, keepdims=True) * inv_m
    scale = jax.lax.rsqrt(var + eps) * g_ref[...]
    y = centered * scale + b_ref[...]
    if relu:
        y = jnp.maximum(y, 0.0)
    o_ref[...] = y.astype(o_ref.dtype)


# ----------------------------------------------------------------------------
# Kernels 2a/2b: M-tiled two-pass variant (conv+stats, then normalize)
# ----------------------------------------------------------------------------
def _conv_stats_kernel(*refs, stride, ksize, nb, ho, wo, cin):
    """Pass 1: conv matmul for one (C-tile, batch-tile) block; accumulate s1/s2.

    refs = (*phase_refs, w_ref, o_ref, s1_ref, s2_ref)
    """
    num_phases = stride * stride
    phase_refs = refs[:num_phases]
    w_ref, o_ref, s1_ref, s2_ref = refs[num_phases:]
    m = nb * ho * wo

    patches = _patch_matrix(phase_refs, stride=stride, ksize=ksize,
                            n=nb, ho=ho, wo=wo, cin=cin)
    acc = jnp.dot(patches, w_ref[...], preferred_element_type=jnp.float32)
    o_ref[...] = acc.astype(o_ref.dtype)

    @pl.when(pl.program_id(1) == 0)
    def _():
        s1_ref[...] = jnp.zeros_like(s1_ref)
        s2_ref[...] = jnp.zeros_like(s2_ref)

    s1_ref[...] += jnp.sum(acc, axis=0, keepdims=True)
    s2_ref[...] += jnp.sum(acc * acc, axis=0, keepdims=True)


def _bn_apply_kernel(x_ref, s1_ref, s2_ref, g_ref, b_ref, o_ref, *, inv_m, relu, eps):
    """Pass 2: elementwise normalize (+ReLU) of the stored conv output."""
    mean = s1_ref[...] * inv_m
    var = jnp.maximum(s2_ref[...] * inv_m - mean * mean, 0.0)
    scale = jax.lax.rsqrt(var + eps) * g_ref[...]
    shift = b_ref[...] - mean * scale
    y = x_ref[...].astype(jnp.float32) * scale + shift
    if relu:
        y = jnp.maximum(y, 0.0)
    o_ref[...] = y.astype(o_ref.dtype)


# ----------------------------------------------------------------------------
# Wrappers
# ----------------------------------------------------------------------------
def _prepare_phases(x_nhwc, *, stride, ksize, padding):
    """Pad, cast to bf16 and phase-decompose so every conv tap is a static slice."""
    n, h, w, cin = x_nhwc.shape
    ho = (h + 2 * padding - ksize) // stride + 1
    wo = (w + 2 * padding - ksize) // stride + 1
    xp = x_nhwc.astype(jnp.bfloat16)
    if padding:
        xp = jnp.pad(xp, ((0, 0), (padding, padding), (padding, padding), (0, 0)))
    need_h = (ksize - 1) // stride + ho
    need_w = (ksize - 1) // stride + wo
    phases = []
    for a in range(stride):
        for b in range(stride):
            ph = xp[:, a::stride, b::stride, :][:, :need_h, :need_w, :]
            dh, dw = need_h - ph.shape[1], need_w - ph.shape[2]
            if dh or dw:
                ph = jnp.pad(ph, ((0, 0), (0, dh), (0, dw), (0, 0)))
            phases.append(ph)
    return phases, ho, wo


def _pick_m_tile(m, row_cap=1024):
    if m <= row_cap:
        return m
    for t in range(row_cap - row_cap % 8, 7, -8):
        if m % t == 0:
            return t
    return m


def _conv_bn_fused_call(phases, wk, g2, b2, *, stride, ksize, n, ho, wo, cin,
                        cp, tc, relu, eps, out_dtype, need_bytes):
    m = n * ho * wo
    k = ksize * ksize * cin
    nc = cp // tc
    num_phases = stride * stride
    phase_shape = phases[0].shape
    out_bytes = jnp.dtype(out_dtype).itemsize

    kernel = functools.partial(_conv_bn_fused_kernel, stride=stride, ksize=ksize,
                               n=n, ho=ho, wo=wo, cin=cin, relu=relu, eps=eps)
    in_specs = ([pl.BlockSpec(phase_shape, lambda j: (0, 0, 0, 0))] * num_phases
                + [pl.BlockSpec((k, tc), lambda j: (0, j)),
                   pl.BlockSpec((1, tc), lambda j: (0, j)),
                   pl.BlockSpec((1, tc), lambda j: (0, j))])
    in_bytes = sum(int(p.size) * 2 for p in phases) + k * cp * 2 + 2 * cp * 4
    cost = pl.CostEstimate(flops=2 * m * k * cp, transcendentals=0,
                           bytes_accessed=int(in_bytes + m * cp * out_bytes))
    return pl.pallas_call(
        kernel,
        out_shape=jax.ShapeDtypeStruct((m, cp), out_dtype),
        grid=(nc,),
        in_specs=in_specs,
        out_specs=pl.BlockSpec((m, tc), lambda j: (0, j)),
        compiler_params=pltpu.CompilerParams(
            dimension_semantics=("parallel",),
            vmem_limit_bytes=_vmem_limit(need_bytes)),
        cost_estimate=cost,
    )(*phases, wk, g2, b2)


def _conv_bn_tiled_call(phases, wk, g2, b2, *, stride, ksize, n, ho, wo, cin,
                        cp, tc, relu, eps, out_dtype):
    """Two-pass M-tiled variant: conv+partial-stats, then normalize."""
    m = n * ho * wo
    k = ksize * ksize * cin
    nc = cp // tc
    num_phases = stride * stride
    out_bytes = jnp.dtype(out_dtype).itemsize

    # Tile M along the batch axis (inputs & conv output tile cleanly, no halo);
    # per-channel stats accumulate across the inner "arbitrary" grid axis.
    nb = 1 if (n > 1 and (ho * wo) % 8 == 0) else n
    nn = n // nb
    mb = nb * ho * wo
    phase_block = (nb,) + phases[0].shape[1:]

    # ---- pass 1: conv matmul (bf16 out) + per-channel partial sums -------------
    p1_kernel = functools.partial(_conv_stats_kernel, stride=stride, ksize=ksize,
                                  nb=nb, ho=ho, wo=wo, cin=cin)
    p1_in_specs = ([pl.BlockSpec(phase_block, lambda j, i: (i, 0, 0, 0))] * num_phases
                   + [pl.BlockSpec((k, tc), lambda j, i: (0, j))])
    p1_out_specs = (pl.BlockSpec((mb, tc), lambda j, i: (i, j)),
                    pl.BlockSpec((1, tc), lambda j, i: (0, j)),
                    pl.BlockSpec((1, tc), lambda j, i: (0, j)))
    p1_need = (2 * num_phases * math.prod(phase_block) * 2 + 2 * k * tc * 2
               + 2 * mb * tc * 2 + mb * k * 2 + 2 * mb * tc * 4)
    p1_cost = pl.CostEstimate(
        flops=2 * m * k * cp, transcendentals=0,
        bytes_accessed=int(sum(int(p.size) * 2 for p in phases) + k * cp * 2
                           + m * cp * 2 + 2 * cp * 4))
    conv_out, s1, s2 = pl.pallas_call(
        p1_kernel,
        out_shape=(jax.ShapeDtypeStruct((m, cp), jnp.bfloat16),
                   jax.ShapeDtypeStruct((1, cp), jnp.float32),
                   jax.ShapeDtypeStruct((1, cp), jnp.float32)),
        grid=(nc, nn),
        in_specs=p1_in_specs,
        out_specs=p1_out_specs,
        compiler_params=pltpu.CompilerParams(
            dimension_semantics=("parallel", "arbitrary"),
            vmem_limit_bytes=_vmem_limit(p1_need)),
        cost_estimate=p1_cost,
    )(*phases, wk)

    # ---- pass 2: elementwise normalize (+ReLU) of the stored conv output -------
    mt = _pick_m_tile(m)
    nm = m // mt
    p2_kernel = functools.partial(_bn_apply_kernel, inv_m=1.0 / m, relu=relu, eps=eps)
    p2_need = 2 * mt * tc * 2 + 2 * mt * tc * out_bytes + (1 << 20)
    p2_cost = pl.CostEstimate(flops=6 * m * cp, transcendentals=0,
                              bytes_accessed=int(m * cp * (2 + out_bytes) + 4 * cp * 4))
    out2d = pl.pallas_call(
        p2_kernel,
        out_shape=jax.ShapeDtypeStruct((m, cp), out_dtype),
        grid=(nm, nc),
        in_specs=[pl.BlockSpec((mt, tc), lambda i, j: (i, j)),
                  pl.BlockSpec((1, tc), lambda i, j: (0, j)),
                  pl.BlockSpec((1, tc), lambda i, j: (0, j)),
                  pl.BlockSpec((1, tc), lambda i, j: (0, j)),
                  pl.BlockSpec((1, tc), lambda i, j: (0, j))],
        out_specs=pl.BlockSpec((mt, tc), lambda i, j: (i, j)),
        compiler_params=pltpu.CompilerParams(
            dimension_semantics=("parallel", "parallel"),
            vmem_limit_bytes=_vmem_limit(p2_need)),
        cost_estimate=p2_cost,
    )(conv_out, s1, s2, g2, b2)
    return out2d


def _conv_bn_from_phases(phases, w_oihw, gamma, beta, *, stride, ksize, n, ho, wo,
                         relu, out_dtype, force_tiled=False, eps=1e-5):
    cin = phases[0].shape[-1]
    cout = w_oihw.shape[0]
    k = ksize * ksize * cin
    m = n * ho * wo

    # Pad Cout up to a lane-dense multiple of 128 (unmasked full-lane stores).
    # Padded channels carry zero weights / gamma=1 / beta=0 and are sliced off below.
    cp = ((cout + 127) // 128) * 128
    wk = jnp.transpose(w_oihw, (2, 3, 1, 0)).reshape(k, cout).astype(jnp.bfloat16)
    g2 = gamma.reshape(1, cout).astype(jnp.float32)
    b2 = beta.reshape(1, cout).astype(jnp.float32)
    if cp != cout:
        wk = jnp.pad(wk, ((0, 0), (0, cp - cout)))
        g2 = jnp.pad(g2, ((0, 0), (0, cp - cout)), constant_values=1.0)
        b2 = jnp.pad(b2, ((0, 0), (0, cp - cout)))

    # 256-wide Cout tiles on the 256-wide-MXU chips (v6e/v7x), 128 on v5e.
    tc = 256 if (cp % 256 == 0 and _prefers_256_tile()) else 128
    out_bytes = jnp.dtype(out_dtype).itemsize

    # Working-set estimate of the fused single-pass path (per Cout tile).
    phase_bytes = sum(int(p.size) * 2 for p in phases)
    fused_need = (2 * phase_bytes + 2 * k * tc * 2 + 2 * m * tc * out_bytes
                  + m * k * 2 + 2 * m * tc * 4)
    use_fused = (not force_tiled) and fused_need <= _vmem_cap_bytes() // 2

    common = dict(stride=stride, ksize=ksize, n=n, ho=ho, wo=wo, cin=cin,
                  cp=cp, tc=tc, relu=relu, eps=eps, out_dtype=out_dtype)
    if use_fused:
        out2d = _conv_bn_fused_call(phases, wk, g2, b2, need_bytes=fused_need, **common)
    else:
        out2d = _conv_bn_tiled_call(phases, wk, g2, b2, **common)

    if cp != cout:
        out2d = out2d[:, :cout]
    return out2d.reshape(n, ho, wo, cout)


def conv_bn(x_nhwc, w_oihw, gamma, beta, *, stride, ksize, padding, relu,
            out_dtype=jnp.float32, force_tiled=False):
    """Fused Conv2d(k, stride, padding) + train-mode BatchNorm2d (+ReLU), NHWC."""
    n = x_nhwc.shape[0]
    phases, ho, wo = _prepare_phases(x_nhwc, stride=stride, ksize=ksize, padding=padding)
    return _conv_bn_from_phases(phases, w_oihw, gamma, beta, stride=stride, ksize=ksize,
                                n=n, ho=ho, wo=wo, relu=relu, out_dtype=out_dtype,
                                force_tiled=force_tiled)


# ----------------------------------------------------------------------------
# BasicBlock parameters & forward
# ----------------------------------------------------------------------------
def init_basic_block(key, inplanes, planes, stride=1):
    """He-normal conv init, BN gamma=1 / beta=0.

    The torch Conv2d layers have bias=True, but each conv is immediately followed
    by training-mode BatchNorm whose mean subtraction cancels the bias exactly,
    so no bias parameters are carried.
    """
    k1, k2, k3 = jax.random.split(key, 3)

    def he(k, cout, cin, ks):
        fan = ks * ks * cout
        return jax.random.normal(k, (cout, cin, ks, ks), jnp.float32) * jnp.sqrt(2.0 / fan)

    p = {
        "conv1_w": he(k1, planes, inplanes, 3),
        "bn1_g": jnp.ones((planes,), jnp.float32),
        "bn1_b": jnp.zeros((planes,), jnp.float32),
        "conv2_w": he(k2, planes, planes, 3),
        "bn2_g": jnp.ones((planes,), jnp.float32),
        "bn2_b": jnp.zeros((planes,), jnp.float32),
        "stride": stride,
        "downsample": None,
    }
    if stride != 1 or inplanes != planes:
        p["downsample"] = {                       # Sequential(conv1x1(stride), BN)
            "w": he(k3, planes, inplanes, 1),
            "bn_g": jnp.ones((planes,), jnp.float32),
            "bn_b": jnp.zeros((planes,), jnp.float32),
        }
    return p


def basic_block_forward_nhwc(x, p, *, force_tiled=False):
    """BasicBlock.forward on an NHWC activation; returns (out, residual), NHWC."""
    stride = p["stride"]
    n = x.shape[0]
    phases1, ho1, wo1 = _prepare_phases(x, stride=stride, ksize=3, padding=1)

    out = _conv_bn_from_phases(phases1, p["conv1_w"], p["bn1_g"], p["bn1_b"],
                               stride=stride, ksize=3, n=n, ho=ho1, wo=wo1,
                               relu=True, out_dtype=jnp.bfloat16,
                               force_tiled=force_tiled)
    out = conv_bn(out, p["conv2_w"], p["bn2_g"], p["bn2_b"],
                  stride=1, ksize=3, padding=1, relu=False,
                  out_dtype=jnp.float32, force_tiled=force_tiled)

    if p["downsample"] is not None:
        ds = p["downsample"]
        # Reuse conv1's phase slabs: with padding=1, padded row/col index 1 is
        # x row/col 0, so phase (a,a) with a = 1 % stride, offset (1-a)//stride,
        # truncated to (Ho, Wo), is exactly x[:, ::stride, ::stride, :] in bf16.
        a = 1 % stride
        off = (1 - a) // stride
        xs = phases1[a * stride + a][:, off:off + ho1, off:off + wo1, :]
        res = conv_bn(xs, ds["w"], ds["bn_g"], ds["bn_b"],
                      stride=1, ksize=1, padding=0, relu=False,
                      out_dtype=jnp.float32, force_tiled=force_tiled)
    else:
        res = x
    return out, res


def basic_block_forward(x_nchw, p, *, force_tiled=False):
    """NCHW interface matching the PyTorch module: returns (out, residual) in NCHW.

    Internally everything runs NHWC (rows = N*H*W on sublanes, C on lanes) so the
    fused conv+BN kernels read/write lane-dense slabs; only the module boundary
    converts layouts.
    """
    x = jnp.transpose(x_nchw, (0, 2, 3, 1))
    out, res = basic_block_forward_nhwc(x, p, force_tiled=force_tiled)
    out = jnp.transpose(out, (0, 3, 1, 2))
    res = x_nchw if p["downsample"] is None else jnp.transpose(res, (0, 3, 1, 2))
    return out, res


# ----------------------------------------------------------------------------
# Pure-JAX reference (for correctness checks only)
# ----------------------------------------------------------------------------
def _ref_conv_bn(x, w, g, b, *, stride, padding, relu):
    y = jax.lax.conv_general_dilated(
        x, jnp.transpose(w, (2, 3, 1, 0)),
        window_strides=(stride, stride),
        padding=[(padding, padding), (padding, padding)],
        dimension_numbers=("NHWC", "HWIO", "NHWC"))
    mean = jnp.mean(y, axis=(0, 1, 2), keepdims=True)
    var = jnp.mean((y - mean) ** 2, axis=(0, 1, 2), keepdims=True)
    y = (y - mean) * jax.lax.rsqrt(var + 1e-5) * g + b
    return jnp.maximum(y, 0.0) if relu else y


def _ref_block(x_nhwc, p):
    out = _ref_conv_bn(x_nhwc, p["conv1_w"], p["bn1_g"], p["bn1_b"],
                       stride=p["stride"], padding=1, relu=True)
    out = _ref_conv_bn(out, p["conv2_w"], p["bn2_g"], p["bn2_b"],
                       stride=1, padding=1, relu=False)
    if p["downsample"] is not None:
        ds = p["downsample"]
        res = _ref_conv_bn(x_nhwc, ds["w"], ds["bn_g"], ds["bn_b"],
                           stride=p["stride"], padding=0, relu=False)
    else:
        res = x_nhwc
    return out, res


# ----------------------------------------------------------------------------
if __name__ == "__main__":
    key = jax.random.PRNGKey(0)
    kx, kp1, kp2 = jax.random.split(key, 3)
    x = jax.random.normal(kx, (2, 64, 16, 16), jnp.float32)   # NCHW, like the module

    # Block with downsample (resnet layer2.0 style): 64 -> 128, stride 2.
    p_down = init_basic_block(kp1, 64, 128, stride=2)
    out, res = basic_block_forward(x, p_down)
    jax.block_until_ready((out, res))
    assert out.shape == (2, 128, 8, 8) and res.shape == (2, 128, 8, 8)
    assert bool(jnp.all(jnp.isfinite(out))) and bool(jnp.all(jnp.isfinite(res)))

    # Identity block: 64 -> 64, stride 1 (exercises the Cout->128 lane padding).
    p_id = init_basic_block(kp2, 64, 64, stride=1)
    out2, res2 = basic_block_forward(x, p_id)
    jax.block_until_ready((out2, res2))
    assert out2.shape == (2, 64, 16, 16) and res2.shape == x.shape
    assert bool(jnp.all(jnp.isfinite(out2)))
    assert bool(jnp.array_equal(res2, x))

    # Pure-JAX reference check (tolerance sized for bf16 MXU operands).
    x_nhwc = jnp.transpose(x, (0, 2, 3, 1))
    ref_out, ref_res = _ref_block(x_nhwc, p_down)
    assert float(jnp.max(jnp.abs(jnp.transpose(out, (0, 2, 3, 1)) - ref_out))) < 0.25
    assert float(jnp.max(jnp.abs(jnp.transpose(res, (0, 2, 3, 1)) - ref_res))) < 0.25
    ref_out2, _ = _ref_block(x_nhwc, p_id)
    assert float(jnp.max(jnp.abs(jnp.transpose(out2, (0, 2, 3, 1)) - ref_out2))) < 0.25

    # Exercise the M-tiled two-pass path explicitly (it is selected automatically
    # when the fused single-pass working set would not fit in scoped VMEM).
    out_t, res_t = basic_block_forward(x, p_down, force_tiled=True)
    jax.block_until_ready((out_t, res_t))
    assert float(jnp.max(jnp.abs(jnp.transpose(out_t, (0, 2, 3, 1)) - ref_out))) < 0.25
    assert float(jnp.max(jnp.abs(jnp.transpose(res_t, (0, 2, 3, 1)) - ref_res))) < 0.25

    print("KERNEL_OK")
</pallas_src>

<mosaic_0001>
module attributes {stable_mosaic.version = 11 : i64} {
  func.func @_conv_bn_fused_kernel(%arg0: i32, %arg1: memref<2x9x9x64xbf16, #tpu.memory_space<vmem>>, %arg2: memref<2x9x9x64xbf16, #tpu.memory_space<vmem>>, %arg3: memref<2x9x9x64xbf16, #tpu.memory_space<vmem>>, %arg4: memref<2x9x9x64xbf16, #tpu.memory_space<vmem>>, %arg5: memref<576x128xbf16, #tpu.memory_space<vmem>>, %arg6: memref<1x128xf32, #tpu.memory_space<vmem>>, %arg7: memref<1x128xf32, #tpu.memory_space<vmem>>, %arg8: memref<128x128xbf16, #tpu.memory_space<vmem>>) attributes {dimension_semantics = [#tpu.dimension_semantics<parallel>], iteration_bounds = array<i64: 1>, scalar_prefetch = 0 : i64, scratch_operands = 0 : i64, tpu.core_type = #tpu.core_type<tc>, window_params = [{pipeline_mode = #tpu.pipeline_mode<synchronous>, transform_indices = @transform_0, window_bounds = array<i64: 2, 9, 9, 64>}, {pipeline_mode = #tpu.pipeline_mode<synchronous>, transform_indices = @transform_1, window_bounds = array<i64: 2, 9, 9, 64>}, {pipeline_mode = #tpu.pipeline_mode<synchronous>, transform_indices = @transform_2, window_bounds = array<i64: 2, 9, 9, 64>}, {pipeline_mode = #tpu.pipeline_mode<synchronous>, transform_indices = @transform_3, window_bounds = array<i64: 2, 9, 9, 64>}, {transform_indices = @transform_4, window_bounds = array<i64: 576, 128>}, {transform_indices = @transform_5, window_bounds = array<i64: 1, 128>}, {transform_indices = @transform_6, window_bounds = array<i64: 1, 128>}, {transform_indices = @transform_7, window_bounds = array<i64: 128, 128>}]} {
    %c0 = arith.constant 0 : index
    %c0_0 = arith.constant 0 : index
    %c0_1 = arith.constant 0 : index
    %c0_2 = arith.constant 0 : index
    %0 = vector.load %arg1[%c0, %c0_0, %c0_1, %c0_2] : memref<2x9x9x64xbf16, #tpu.memory_space<vmem>>, vector<2x8x8x64xbf16>
    %1 = vector.shape_cast %0 : vector<2x8x8x64xbf16> to vector<128x64xbf16>
    %c0_3 = arith.constant 0 : index
    %c0_4 = arith.constant 0 : index
    %c0_5 = arith.constant 0 : index
    %c0_6 = arith.constant 0 : index
    %2 = vector.load %arg2[%c0_3, %c0_4, %c0_5, %c0_6] : memref<2x9x9x64xbf16, #tpu.memory_space<vmem>>, vector<2x8x8x64xbf16>
    %3 = vector.shape_cast %2 : vector<2x8x8x64xbf16> to vector<128x64xbf16>
    %c0_7 = arith.constant 0 : index
    %c0_8 = arith.constant 0 : index
    %c1 = arith.constant 1 : index
    %c0_9 = arith.constant 0 : index
    %4 = vector.load %arg1[%c0_7, %c0_8, %c1, %c0_9] : memref<2x9x9x64xbf16, #tpu.memory_space<vmem>>, vector<2x8x8x64xbf16>
    %5 = vector.shape_cast %4 : vector<2x8x8x64xbf16> to vector<128x64xbf16>
    %c0_10 = arith.constant 0 : index
    %c0_11 = arith.constant 0 : index
    %c0_12 = arith.constant 0 : index
    %c0_13 = arith.constant 0 : index
    %6 = vector.load %arg3[%c0_10, %c0_11, %c0_12, %c0_13] : memref<2x9x9x64xbf16, #tpu.memory_space<vmem>>, vector<2x8x8x64xbf16>
    %7 = vector.shape_cast %6 : vector<2x8x8x64xbf16> to vector<128x64xbf16>
    %c0_14 = arith.constant 0 : index
    %c0_15 = arith.constant 0 : index
    %c0_16 = arith.constant 0 : index
    %c0_17 = arith.constant 0 : index
    %8 = vector.load %arg4[%c0_14, %c0_15, %c0_16, %c0_17] : memref<2x9x9x64xbf16, #tpu.memory_space<vmem>>, vector<2x8x8x64xbf16>
    %9 = vector.shape_cast %8 : vector<2x8x8x64xbf16> to vector<128x64xbf16>
    %c0_18 = arith.constant 0 : index
    %c0_19 = arith.constant 0 : index
    %c1_20 = arith.constant 1 : index
    %c0_21 = arith.constant 0 : index
    %10 = vector.load %arg3[%c0_18, %c0_19, %c1_20, %c0_21] : memref<2x9x9x64xbf16, #tpu.memory_space<vmem>>, vector<2x8x8x64xbf16>
    %11 = vector.shape_cast %10 : vector<2x8x8x64xbf16> to vector<128x64xbf16>
    %c0_22 = arith.constant 0 : index
    %c1_23 = arith.constant 1 : index
    %c0_24 = arith.constant 0 : index
    %c0_25 = arith.constant 0 : index
    %12 = vector.load %arg1[%c0_22, %c1_23, %c0_24, %c0_25] : memref<2x9x9x64xbf16, #tpu.memory_space<vmem>>, vector<2x8x8x64xbf16>
    %13 = vector.shape_cast %12 : vector<2x8x8x64xbf16> to vector<128x64xbf16>
    %c0_26 = arith.constant 0 : index
    %c1_27 = arith.constant 1 : index
    %c0_28 = arith.constant 0 : index
    %c0_29 = arith.constant 0 : index
    %14 = vector.load %arg2[%c0_26, %c1_27, %c0_28, %c0_29] : memref<2x9x9x64xbf16, #tpu.memory_space<vmem>>, vector<2x8x8x64xbf16>
    %15 = vector.shape_cast %14 : vector<2x8x8x64xbf16> to vector<128x64xbf16>
    %c0_30 = arith.constant 0 : index
    %c1_31 = arith.constant 1 : index
    %c1_32 = arith.constant 1 : index
    %c0_33 = arith.constant 0 : index
    %16 = vector.load %arg1[%c0_30, %c1_31, %c1_32, %c0_33] : memref<2x9x9x64xbf16, #tpu.memory_space<vmem>>, vector<2x8x8x64xbf16>
    %17 = vector.shape_cast %16 : vector<2x8x8x64xbf16> to vector<128x64xbf16>
    %18 = tpu.concatenate %1, %3, %5, %7, %9, %11, %13, %15, %17 in 1 : vector<128x64xbf16>, vector<128x64xbf16>, vector<128x64xbf16>, vector<128x64xbf16>, vector<128x64xbf16>, vector<128x64xbf16>, vector<128x64xbf16>, vector<128x64xbf16>, vector<128x64xbf16> -> vector<128x576xbf16>
    %c0_34 = arith.constant 0 : index
    %c0_35 = arith.constant 0 : index
    %19 = vector.load %arg5[%c0_34, %c0_35] : memref<576x128xbf16, #tpu.memory_space<vmem>>, vector<576x128xbf16>
    %cst = arith.constant dense<0.000000e+00> : vector<128x128xf32>
    %20 = tpu.matmul %18, %19, %cst {dimension_numbers = #tpu.dot_dimension_numbers<[1], [0], [0], [1], [0, 0, 1, 1], [], []>} : vector<128x576xbf16>, vector<576x128xbf16>, vector<128x128xf32> -> vector<128x128xf32>
    %cst_36 = arith.constant dense<0.000000e+00> : vector<128xf32>
    %21 = vector.multi_reduction <add>, %20, %cst_36 [0] : vector<128x128xf32> to vector<128xf32>
    %22 = vector.shape_cast %21 : vector<128xf32> to vector<1x128xf32>
    %cst_37 = arith.constant 7.812500e-03 : f32
    %23 = vector.broadcast %cst_37 : f32 to vector<1x128xf32>
    %24 = arith.mulf %22, %23 : vector<1x128xf32>
    %25 = vector.broadcast %24 : vector<1x128xf32> to vector<128x128xf32>
    %26 = arith.subf %20, %25 : vector<128x128xf32>
    %27 = arith.mulf %26, %26 : vector<128x128xf32>
    %cst_38 = arith.constant dense<0.000000e+00> : vector<128xf32>
    %28 = vector.multi_reduction <add>, %27, %cst_38 [0] : vector<128x128xf32> to vector<128xf32>
    %29 = vector.shape_cast %28 : vector<128xf32> to vector<1x128xf32>
    %cst_39 = arith.constant 7.812500e-03 : f32
    %30 = vector.broadcast %cst_39 : f32 to vector<1x128xf32>
    %31 = arith.mulf %29, %30 : vector<1x128xf32>
    %cst_40 = arith.constant 9.99999974E-6 : f32
    %32 = vector.broadcast %cst_40 : f32 to vector<1x128xf32>
    %33 = arith.addf %31, %32 : vector<1x128xf32>
    %34 = math.rsqrt %33 : vector<1x128xf32>
    %c0_41 = arith.constant 0 : index
    %c0_42 = arith.constant 0 : index
    %35 = vector.load %arg6[%c0_41, %c0_42] : memref<1x128xf32, #tpu.memory_space<vmem>>, vector<1x128xf32>
    %36 = arith.mulf %34, %35 : vector<1x128xf32>
    %37 = vector.broadcast %36 : vector<1x128xf32> to vector<128x128xf32>
    %38 = arith.mulf %26, %37 : vector<128x128xf32>
    %c0_43 = arith.constant 0 : index
    %c0_44 = arith.constant 0 : index
    %39 = vector.load %arg7[%c0_43, %c0_44] : memref<1x128xf32, #tpu.memory_space<vmem>>, vector<1x128xf32>
    %40 = vector.broadcast %39 : vector<1x128xf32> to vector<128x128xf32>
    %41 = arith.addf %38, %40 : vector<128x128xf32>
    %cst_45 = arith.constant 0.000000e+00 : f32
    %42 = vector.broadcast %cst_45 : f32 to vector<128x128xf32>
    %43 = arith.maximumf %41, %42 : vector<128x128xf32>
    %44 = arith.truncf %43 : vector<128x128xf32> to vector<128x128xbf16>
    %c0_46 = arith.constant 0 : index
    %c0_47 = arith.constant 0 : index
    %45 = vector.load %arg8[%c0_46, %c0_47] : memref<128x128xbf16, #tpu.memory_space<vmem>>, vector<128x128xbf16>
    tpu.vector_store %arg8[%c0_46, %c0_47], %44 {strides = array<i32>} : memref<128x128xbf16, #tpu.memory_space<vmem>>, vector<128x128xbf16>,
    return
  }
  func.func @transform_0(%arg0: i32) -> (i32, i32, i32, i32) {
    %c0_i32 = arith.constant 0 : i32
    %c0_i32_0 = arith.constant 0 : i32
    %c0_i32_1 = arith.constant 0 : i32
    %c0_i32_2 = arith.constant 0 : i32
    %c0_i32_3 = arith.constant 0 : i32
    return %c0_i32, %c0_i32_0, %c0_i32_1, %c0_i32_2 : i32, i32, i32, i32
  }
  func.func @transform_1(%arg0: i32) -> (i32, i32, i32, i32) {
    %c0_i32 = arith.constant 0 : i32
    %c0_i32_0 = arith.constant 0 : i32
    %c0_i32_1 = arith.constant 0 : i32
    %c0_i32_2 = arith.constant 0 : i32
    %c0_i32_3 = arith.constant 0 : i32
    return %c0_i32, %c0_i32_0, %c0_i32_1, %c0_i32_2 : i32, i32, i32, i32
  }
  func.func @transform_2(%arg0: i32) -> (i32, i32, i32, i32) {
    %c0_i32 = arith.constant 0 : i32
    %c0_i32_0 = arith.constant 0 : i32
    %c0_i32_1 = arith.constant 0 : i32
    %c0_i32_2 = arith.constant 0 : i32
    %c0_i32_3 = arith.constant 0 : i32
    return %c0_i32, %c0_i32_0, %c0_i32_1, %c0_i32_2 : i32, i32, i32, i32
  }
  func.func @transform_3(%arg0: i32) -> (i32, i32, i32, i32) {
    %c0_i32 = arith.constant 0 : i32
    %c0_i32_0 = arith.constant 0 : i32
    %c0_i32_1 = arith.constant 0 : i32
    %c0_i32_2 = arith.constant 0 : i32
    %c0_i32_3 = arith.constant 0 : i32
    return %c0_i32, %c0_i32_0, %c0_i32_1, %c0_i32_2 : i32, i32, i32, i32
  }
  func.func @transform_4(%arg0: i32) -> (i32, i32) {
    %c0_i32 = arith.constant 0 : i32
    %c0_i32_0 = arith.constant 0 : i32
    return %c0_i32, %arg0 : i32, i32
  }
  func.func @transform_5(%arg0: i32) -> (i32, i32) {
    %c0_i32 = arith.constant 0 : i32
    %c0_i32_0 = arith.constant 0 : i32
    return %c0_i32, %arg0 : i32, i32
  }
  func.func @transform_6(%arg0: i32) -> (i32, i32) {
    %c0_i32 = arith.constant 0 : i32
    %c0_i32_0 = arith.constant 0 : i32
    return %c0_i32, %arg0 : i32, i32
  }
  func.func @transform_7(%arg0: i32) -> (i32, i32) {
    %c0_i32 = arith.constant 0 : i32
    %c0_i32_0 = arith.constant 0 : i32
    return %c0_i32, %arg0 : i32, i32
  }
}

</mosaic_0001>

<llo_original>
// kernel: tpu_custom_call.1
$region0: #{tpu_custom_call.1}
  #allocation0 [shape = 'u32[]', space=smem, size = 0x4, offset = 0x4, fixed_abs, tag = 'smem constant byte address 0x4 - core index']
  #allocation1 [shape = 'u32[144,128]{1,0:T(1,128)}', space=vmem, size = 0x12000, scoped, tag = 'internal scratch']
  %s0 = inlined_call_operand.vmem [shape: bf16[2,9,9,64], index: 0, kind: input, shape index: {}]
  %s1 = inlined_call_operand.vmem [shape: bf16[2,9,9,64], index: 1, kind: input, shape index: {}]
  %s2 = inlined_call_operand.vmem [shape: bf16[2,9,9,64], index: 2, kind: input, shape index: {}]
  %s3 = inlined_call_operand.vmem [shape: bf16[2,9,9,64], index: 3, kind: input, shape index: {}]
  %s4 = inlined_call_operand.vmem [shape: bf16[576,128], index: 4, kind: input, shape index: {}]
  %s5 = inlined_call_operand.vmem [shape: f32[1,128], index: 5, kind: input, shape index: {}]
  %s6 = inlined_call_operand.vmem [shape: f32[1,128], index: 6, kind: input, shape index: {}]
  %s7 = inlined_call_operand.hbm [shape: bf16[128,128], index: 7, kind: output, shape index: {}]
  %s8 = sld [smem:[#allocation0]]
  $region38: #{tpu_custom_call.1} parent=0
    _
  %s10 = ssub.s32 1, %s8
  %s11 = scalar_select 0, %s10, %s8
  $region1: #{tpu_custom_call.1} parent=0
    #allocation2 [shape = 'u8[32768]{0}', space=vmem, size = 0x8000, scoped, tag = 'output window, operand 0, single buffered']
    #allocation3 [shape = 's32[1]{0}', space=sflag, size = 0x4, scoped, tag = 'scoped memory for tpu_custom_call.1']
    %12 = vsyncpa [#allocation3], 0
    // Predicated region
    $region2: #{tpu_custom_call.1} parent=1 // pred_check
      _
    $region3: #{tpu_custom_call.1} parent=1 // pred_check_branch
      %14 = sbr.rel (0) target = $region5
    $region4: #{tpu_custom_call.1} parent=1 // pred_region
      _
    $region5: #{tpu_custom_call.1} parent=1 // pred_fallthru
      _
    // Predicated region
    $region6: #{tpu_custom_call.1} parent=1 // pred_check
      _
    $region7: #{tpu_custom_call.1} parent=1 // pred_check_branch
      %16 = sbr.rel (0) target = $region9
    $region8: #{tpu_custom_call.1} parent=1 // pred_region
      _
    $region9: #{tpu_custom_call.1} parent=1 // pred_fallthru
      _
    // Predicated region
    $region10: #{tpu_custom_call.1} parent=1 // pred_check
      _
    $region11: #{tpu_custom_call.1} parent=1 // pred_check_branch
      %18 = sbr.rel (0) target = $region13
    $region12: #{tpu_custom_call.1} parent=1 // pred_region
      _
    $region13: #{tpu_custom_call.1} parent=1 // pred_fallthru
      _
    // Predicated region
    $region14: #{tpu_custom_call.1} parent=1 // pred_check
      _
    $region15: #{tpu_custom_call.1} parent=1 // pred_check_branch
      %20 = sbr.rel (0) target = $region17
    $region16: #{tpu_custom_call.1} parent=1 // pred_region
      _
    $region17: #{tpu_custom_call.1} parent=1 // pred_fallthru
      _
    // Predicated region
    $region18: #{tpu_custom_call.1} parent=1 // pred_check
      _
    $region19: #{tpu_custom_call.1} parent=1 // pred_check_branch
      %22 = sbr.rel (0) target = $region21
    $region20: #{tpu_custom_call.1} parent=1 // pred_region
      _
    $region21: #{tpu_custom_call.1} parent=1 // pred_fallthru
      _
    // Predicated region
    $region22: #{tpu_custom_call.1} parent=1 // pred_check
      _
    $region23: #{tpu_custom_call.1} parent=1 // pred_check_branch
      %24 = sbr.rel (0) target = $region25
    $region24: #{tpu_custom_call.1} parent=1 // pred_region
      _
    $region25: #{tpu_custom_call.1} parent=1 // pred_fallthru
      _
    // Predicated region
    $region26: #{tpu_custom_call.1} parent=1 // pred_check
      _
    $region27: #{tpu_custom_call.1} parent=1 // pred_check_branch
      %26 = sbr.rel (0) target = $region29
    $region28: #{tpu_custom_call.1} parent=1 // pred_region
      _
    $region29: #{tpu_custom_call.1} parent=1 // pred_fallthru
      _
    %v28 = vld [vmem:[%s0] sm:$0xf]
    %v29 = vld [vmem:[%s0 + $0x8] sm:$0xf]
    %v30 = vld [vmem:[%s0 + $0x10] sm:$0xf]
    %v31 = vld [vmem:[%s0 + $0x18] sm:$0xf]
    %v32 = vld [vmem:[%s0 + $0x20] sm:$0xf]
    %v33 = vld [vmem:[%s0 + $0x28] sm:$0xf]
    %v34 = vld [vmem:[%s0 + $0x30] sm:$0xf]
    %v35 = vld [vmem:[%s0 + $0x38] sm:$0xf]
    %v36 = vld [vmem:[%s0 + $0x48] sm:$0xf]
    %v37 = vld [vmem:[%s0 + $0x50] sm:$0xf]
    %v38 = vld [vmem:[%s0 + $0x58] sm:$0xf]
    %v39 = vld [vmem:[%s0 + $0x60] sm:$0xf]
    %v40 = vld [vmem:[%s0 + $0x68] sm:$0xf]
    %v41 = vld [vmem:[%s0 + $0x70] sm:$0xf]
    %v42 = vld [vmem:[%s0 + $0x78] sm:$0xf]
    %v43 = vld [vmem:[%s0 + $0x80] sm:$0xf]
    %v44 = vld [vmem:[%s1] sm:$0xf]
    %v45 = vld [vmem:[%s1 + $0x8] sm:$0xf]
    %v46 = vld [vmem:[%s1 + $0x10] sm:$0xf]
    %v47 = vld [vmem:[%s1 + $0x18] sm:$0xf]
    %v48 = vld [vmem:[%s1 + $0x20] sm:$0xf]
    %v49 = vld [vmem:[%s1 + $0x28] sm:$0xf]
    %v50 = vld [vmem:[%s1 + $0x30] sm:$0xf]
    %v51 = vld [vmem:[%s1 + $0x38] sm:$0xf]
    %v52 = vld [vmem:[%s1 + $0x48] sm:$0xf]
    %v53 = vld [vmem:[%s1 + $0x50] sm:$0xf]
    %v54 = vld [vmem:[%s1 + $0x58] sm:$0xf]
    %v55 = vld [vmem:[%s1 + $0x60] sm:$0xf]
    %v56 = vld [vmem:[%s1 + $0x68] sm:$0xf]
    %v57 = vld [vmem:[%s1 + $0x70] sm:$0xf]
    %v58 = vld [vmem:[%s1 + $0x78] sm:$0xf]
    %v59 = vld [vmem:[%s1 + $0x80] sm:$0xf]
    %v60 = vld [vmem:[%s0 + $0x4] sm:$0x1]
    %v61 = vld [vmem:[%s0 + $0xc] sm:$0x1]
    %v62 = vld [vmem:[%s0 + $0x14] sm:$0x1]
    %v63 = vld [vmem:[%s0 + $0x1c] sm:$0x1]
    %v64 = vld [vmem:[%s0 + $0x24] sm:$0x1]
    %v65 = vld [vmem:[%s0 + $0x2c] sm:$0x1]
    %v66 = vld [vmem:[%s0 + $0x34] sm:$0x1]
    %v67 = vld [vmem:[%s0 + $0x3c] sm:$0x1]
    %v68 = vld [vmem:[%s0 + $0x4c] sm:$0x1]
    %v69 = vld [vmem:[%s0 + $0x54] sm:$0x1]
    %v70 = vld [vmem:[%s0 + $0x5c] sm:$0x1]
    %v71 = vld [vmem:[%s0 + $0x64] sm:$0x1]
    %v72 = vld [vmem:[%s0 + $0x6c] sm:$0x1]
    %v73 = vld [vmem:[%s0 + $0x74] sm:$0x1]
    %v74 = vld [vmem:[%s0 + $0x7c] sm:$0x1]
    %v75 = vld [vmem:[%s0 + $0x84] sm:$0x1]
    %vm76 = vsmask.f32 3328
    %vm77 = vsmask.f32 7440
    %vm78 = vmor %vm76, %vm77
    %v80 = vshrl.u32 %v28, 16
    %v82 = vrot.slane %v80, 4
    %v83 = vshll.u32 %v28, 16
    %v85 = vrot.slane %v83, 5
    %v86 = vor.u32 %v82, %v85
    %v87 = vrot.slane %v86, 4
    %v89 = vshll.u32 %v60, 16
    %v91 = vrot.slane %v89, 5
    %v92 = vsel %vm78, %v87, %v91
    %v94 = vshrl.u32 %v29, 16
    %v96 = vrot.slane %v94, 4
    %v97 = vshll.u32 %v29, 16
    %v99 = vrot.slane %v97, 5
    %v100 = vor.u32 %v96, %v99
    %v101 = vrot.slane %v100, 4
    %v103 = vshll.u32 %v61, 16
    %v105 = vrot.slane %v103, 5
    %v106 = vsel %vm78, %v101, %v105
    %v108 = vshrl.u32 %v30, 16
    %v110 = vrot.slane %v108, 4
    %v111 = vshll.u32 %v30, 16
    %v113 = vrot.slane %v111, 5
    %v114 = vor.u32 %v110, %v113
    %v115 = vrot.slane %v114, 4
    %v117 = vshll.u32 %v62, 16
    %v119 = vrot.slane %v117, 5
    %v120 = vsel %vm78, %v115, %v119
    %v122 = vshrl.u32 %v31, 16
    %v124 = vrot.slane %v122, 4
    %v125 = vshll.u32 %v31, 16
    %v127 = vrot.slane %v125, 5
    %v128 = vor.u32 %v124, %v127
    %v129 = vrot.slane %v128, 4
    %v131 = vshll.u32 %v63, 16
    %v133 = vrot.slane %v131, 5
    %v134 = vsel %vm78, %v129, %v133
    %v136 = vshrl.u32 %v32, 16
    %v138 = vrot.slane %v136, 4
    %v139 = vshll.u32 %v32, 16
    %v141 = vrot.slane %v139, 5
    %v142 = vor.u32 %v138, %v141
    %v143 = vrot.slane %v142, 4
    %v145 = vshll.u32 %v64, 16
    %v147 = vrot.slane %v145, 5
    %v148 = vsel %vm78, %v143, %v147
    %v150 = vshrl.u32 %v33, 16
    %v152 = vrot.slane %v150, 4
    %v153 = vshll.u32 %v33, 16
    %v155 = vrot.slane %v153, 5
    %v156 = vor.u32 %v152, %v155
    %v157 = vrot.slane %v156, 4
    %v159 = vshll.u32 %v65, 16
    %v161 = vrot.slane %v159, 5
    %v162 = vsel %vm78, %v157, %v161
    %v164 = vshrl.u32 %v34, 16
    %v166 = vrot.slane %v164, 4
    %v167 = vshll.u32 %v34, 16
    %v169 = vrot.slane %v167, 5
    %v170 = vor.u32 %v166, %v169
    %v171 = vrot.slane %v170, 4
    %v173 = vshll.u32 %v66, 16
    %v175 = vrot.slane %v173, 5
    %v176 = vsel %vm78, %v171, %v175
    %v178 = vshrl.u32 %v35, 16
    %v180 = vrot.slane %v178, 4
    %v181 = vshll.u32 %v35, 16
    %v183 = vrot.slane %v181, 5
    %v184 = vor.u32 %v180, %v183
    %v185 = vrot.slane %v184, 4
    %v187 = vshll.u32 %v67, 16
    %v189 = vrot.slane %v187, 5
    %v190 = vsel %vm78, %v185, %v189
    %v192 = vshrl.u32 %v36, 16
    %v194 = vrot.slane %v192, 4
    %v195 = vshll.u32 %v36, 16
    %v197 = vrot.slane %v195, 5
    %v198 = vor.u32 %v194, %v197
    %v199 = vrot.slane %v198, 4
    %v201 = vshll.u32 %v68, 16
    %v203 = vrot.slane %v201, 5
    %v204 = vsel %vm78, %v199, %v203
    %v206 = vshrl.u32 %v37, 16
    %v208 = vrot.slane %v206, 4
    %v209 = vshll.u32 %v37, 16
    %v211 = vrot.slane %v209, 5
    %v212 = vor.u32 %v208, %v211
    %v213 = vrot.slane %v212, 4
    %v215 = vshll.u32 %v69, 16
    %v217 = vrot.slane %v215, 5
    %v218 = vsel %vm78, %v213, %v217
    %v220 = vshrl.u32 %v38, 16
    %v222 = vrot.slane %v220, 4
    %v223 = vshll.u32 %v38, 16
    %v225 = vrot.slane %v223, 5
    %v226 = vor.u32 %v222, %v225
    %v227 = vrot.slane %v226, 4
    %v229 = vshll.u32 %v70, 16
    %v231 = vrot.slane %v229, 5
    %v232 = vsel %vm78, %v227, %v231
    %v234 = vshrl.u32 %v39, 16
    %v236 = vrot.slane %v234, 4
    %v237 = vshll.u32 %v39, 16
    %v239 = vrot.slane %v237, 5
    %v240 = vor.u32 %v236, %v239
    %v241 = vrot.slane %v240, 4
    %v243 = vshll.u32 %v71, 16
    %v245 = vrot.slane %v243, 5
    %v246 = vsel %vm78, %v241, %v245
    %v248 = vshrl.u32 %v40, 16
    %v250 = vrot.slane %v248, 4
    %v251 = vshll.u32 %v40, 16
    %v253 = vrot.slane %v251, 5
    %v254 = vor.u32 %v250, %v253
    %v255 = vrot.slane %v254, 4
    %v257 = vshll.u32 %v72, 16
    %v259 = vrot.slane %v257, 5
    %v260 = vsel %vm78, %v255, %v259
    %v262 = vshrl.u32 %v41, 16
    %v264 = vrot.slane %v262, 4
    %v265 = vshll.u32 %v41, 16
    %v267 = vrot.slane %v265, 5
    %v268 = vor.u32 %v264, %v267
    %v269 = vrot.slane %v268, 4
    %v271 = vshll.u32 %v73, 16
    %v273 = vrot.slane %v271, 5
    %v274 = vsel %vm78, %v269, %v273
    %v276 = vshrl.u32 %v42, 16
    %v278 = vrot.slane %v276, 4
    %v279 = vshll.u32 %v42, 16
    %v281 = vrot.slane %v279, 5
    %v282 = vor.u32 %v278, %v281
    %v283 = vrot.slane %v282, 4
    %v285 = vshll.u32 %v74, 16
    %v287 = vrot.slane %v285, 5
    %v288 = vsel %vm78, %v283, %v287
    %v290 = vshrl.u32 %v43, 16
    %v292 = vrot.slane %v290, 4
    %v293 = vshll.u32 %v43, 16
    %v295 = vrot.slane %v293, 5
    %v296 = vor.u32 %v292, %v295
    %v297 = vrot.slane %v296, 4
    %v299 = vshll.u32 %v75, 16
    %v301 = vrot.slane %v299, 5
    %v302 = vsel %vm78, %v297, %v301
    %v303 = vld [vmem:[%s2] sm:$0xf]
    %v304 = vld [vmem:[%s2 + $0x8] sm:$0xf]
    %v305 = vld [vmem:[%s2 + $0x10] sm:$0xf]
    %v306 = vld [vmem:[%s2 + $0x18] sm:$0xf]
    %v307 = vld [vmem:[%s2 + $0x20] sm:$0xf]
    %v308 = vld [vmem:[%s2 + $0x28] sm:$0xf]
    %v309 = vld [vmem:[%s2 + $0x30] sm:$0xf]
    %v310 = vld [vmem:[%s2 + $0x38] sm:$0xf]
    %v311 = vld [vmem:[%s2 + $0x48] sm:$0xf]
    %v312 = vld [vmem:[%s2 + $0x50] sm:$0xf]
    %v313 = vld [vmem:[%s2 + $0x58] sm:$0xf]
    %v314 = vld [vmem:[%s2 + $0x60] sm:$0xf]
    %v315 = vld [vmem:[%s2 + $0x68] sm:$0xf]
    %v316 = vld [vmem:[%s2 + $0x70] sm:$0xf]
    %v317 = vld [vmem:[%s2 + $0x78] sm:$0xf]
    %v318 = vld [vmem:[%s2 + $0x80] sm:$0xf]
    %v319 = vld [vmem:[%s3] sm:$0xf]
    %v320 = vld [vmem:[%s3 + $0x8] sm:$0xf]
    %v321 = vld [vmem:[%s3 + $0x10] sm:$0xf]
    %v322 = vld [vmem:[%s3 + $0x18] sm:$0xf]
    %v323 = vld [vmem:[%s3 + $0x20] sm:$0xf]
    %v324 = vld [vmem:[%s3 + $0x28] sm:$0xf]
    %v325 = vld [vmem:[%s3 + $0x30] sm:$0xf]
    %v326 = vld [vmem:[%s3 + $0x38] sm:$0xf]
    %v327 = vld [vmem:[%s3 + $0x48] sm:$0xf]
    %v328 = vld [vmem:[%s3 + $0x50] sm:$0xf]
    %v329 = vld [vmem:[%s3 + $0x58] sm:$0xf]
    %v330 = vld [vmem:[%s3 + $0x60] sm:$0xf]
    %v331 = vld [vmem:[%s3 + $0x68] sm:$0xf]
    %v332 = vld [vmem:[%s3 + $0x70] sm:$0xf]
    %v333 = vld [vmem:[%s3 + $0x78] sm:$0xf]
    %v334 = vld [vmem:[%s3 + $0x80] sm:$0xf]
    %v335 = vld [vmem:[%s2 + $0x4] sm:$0x1]
    %v336 = vld [vmem:[%s2 + $0xc] sm:$0x1]
    %v337 = vld [vmem:[%s2 + $0x14] sm:$0x1]
    %v338 = vld [vmem:[%s2 + $0x1c] sm:$0x1]
    %v339 = vld [vmem:[%s2 + $0x24] sm:$0x1]
    %v340 = vld [vmem:[%s2 + $0x2c] sm:$0x1]
    %v341 = vld [vmem:[%s2 + $0x34] sm:$0x1]
    %v342 = vld [vmem:[%s2 + $0x3c] sm:$0x1]
    %v343 = vld [vmem:[%s2 + $0x4c] sm:$0x1]
    %v344 = vld [vmem:[%s2 + $0x54] sm:$0x1]
    %v345 = vld [vmem:[%s2 + $0x5c] sm:$0x1]
    %v346 = vld [vmem:[%s2 + $0x64] sm:$0x1]
    %v347 = vld [vmem:[%s2 + $0x6c] sm:$0x1]
    %v348 = vld [vmem:[%s2 + $0x74] sm:$0x1]
    %v349 = vld [vmem:[%s2 + $0x7c] sm:$0x1]
    %v350 = vld [vmem:[%s2 + $0x84] sm:$0x1]
    %v352 = vshrl.u32 %v303, 16
    %v354 = vrot.slane %v352, 4
    %v355 = vshll.u32 %v303, 16
    %v357 = vrot.slane %v355, 5
    %v358 = vor.u32 %v354, %v357
    %v359 = vrot.slane %v358, 4
    %v361 = vshll.u32 %v335, 16
    %v363 = vrot.slane %v361, 5
    %v364 = vsel %vm78, %v359, %v363
    %v366 = vshrl.u32 %v304, 16
    %v368 = vrot.slane %v366, 4
    %v369 = vshll.u32 %v304, 16
    %v371 = vrot.slane %v369, 5
    %v372 = vor.u32 %v368, %v371
    %v373 = vrot.slane %v372, 4
    %v375 = vshll.u32 %v336, 16
    %v377 = vrot.slane %v375, 5
    %v378 = vsel %vm78, %v373, %v377
    %v380 = vshrl.u32 %v305, 16
    %v382 = vrot.slane %v380, 4
    %v383 = vshll.u32 %v305, 16
    %v385 = vrot.slane %v383, 5
    %v386 = vor.u32 %v382, %v385
    %v387 = vrot.slane %v386, 4
    %v389 = vshll.u32 %v337, 16
    %v391 = vrot.slane %v389, 5
    %v392 = vsel %vm78, %v387, %v391
    %v394 = vshrl.u32 %v306, 16
    %v396 = vrot.slane %v394, 4
    %v397 = vshll.u32 %v306, 16
    %v399 = vrot.slane %v397, 5
    %v400 = vor.u32 %v396, %v399
    %v401 = vrot.slane %v400, 4
    %v403 = vshll.u32 %v338, 16
    %v405 = vrot.slane %v403, 5
    %v406 = vsel %vm78, %v401, %v405
    %v408 = vshrl.u32 %v307, 16
    %v410 = vrot.slane %v408, 4
    %v411 = vshll.u32 %v307, 16
    %v413 = vrot.slane %v411, 5
    %v414 = vor.u32 %v410, %v413
    %v415 = vrot.slane %v414, 4
    %v417 = vshll.u32 %v339, 16
    %v419 = vrot.slane %v417, 5
    %v420 = vsel %vm78, %v415, %v419
    %v422 = vshrl.u32 %v308, 16
    %v424 = vrot.slane %v422, 4
    %v425 = vshll.u32 %v308, 16
    %v427 = vrot.slane %v425, 5
    %v428 = vor.u32 %v424, %v427
    %v429 = vrot.slane %v428, 4
    %v431 = vshll.u32 %v340, 16
    %v433 = vrot.slane %v431, 5
    %v434 = vsel %vm78, %v429, %v433
    %v436 = vshrl.u32 %v309, 16
    %v438 = vrot.slane %v436, 4
    %v439 = vshll.u32 %v309, 16
    %v441 = vrot.slane %v439, 5
    %v442 = vor.u32 %v438, %v441
    %v443 = vrot.slane %v442, 4
    %v445 = vshll.u32 %v341, 16
    %v447 = vrot.slane %v445, 5
    %v448 = vsel %vm78, %v443, %v447
    %v450 = vshrl.u32 %v310, 16
    %v452 = vrot.slane %v450, 4
    %v453 = vshll.u32 %v310, 16
    %v455 = vrot.slane %v453, 5
    %v456 = vor.u32 %v452, %v455
    %v457 = vrot.slane %v456, 4
    %v459 = vshll.u32 %v342, 16
    %v461 = vrot.slane %v459, 5
    %v462 = vsel %vm78, %v457, %v461
    %v464 = vshrl.u32 %v311, 16
    %v466 = vrot.slane %v464, 4
    %v467 = vshll.u32 %v311, 16
    %v469 = vrot.slane %v467, 5
    %v470 = vor.u32 %v466, %v469
    %v471 = vrot.slane %v470, 4
    %v473 = vshll.u32 %v343, 16
    %v475 = vrot.slane %v473, 5
    %v476 = vsel %vm78, %v471, %v475
    %v478 = vshrl.u32 %v312, 16
    %v480 = vrot.slane %v478, 4
    %v481 = vshll.u32 %v312, 16
    %v483 = vrot.slane %v481, 5
    %v484 = vor.u32 %v480, %v483
    %v485 = vrot.slane %v484, 4
    %v487 = vshll.u32 %v344, 16
    %v489 = vrot.slane %v487, 5
    %v490 = vsel %vm78, %v485, %v489
    %v492 = vshrl.u32 %v313, 16
    %v494 = vrot.slane %v492, 4
    %v495 = vshll.u32 %v313, 16
    %v497 = vrot.slane %v495, 5
    %v498 = vor.u32 %v494, %v497
    %v499 = vrot.slane %v498, 4
    %v501 = vshll.u32 %v345, 16
    %v503 = vrot.slane %v501, 5
    %v504 = vsel %vm78, %v499, %v503
    %v506 = vshrl.u32 %v314, 16
    %v508 = vrot.slane %v506, 4
    %v509 = vshll.u32 %v314, 16
    %v511 = vrot.slane %v509, 5
    %v512 = vor.u32 %v508, %v511
    %v513 = vrot.slane %v512, 4
    %v515 = vshll.u32 %v346, 16
    %v517 = vrot.slane %v515, 5
    %v518 = vsel %vm78, %v513, %v517
    %v520 = vshrl.u32 %v315, 16
    %v522 = vrot.slane %v520, 4
    %v523 = vshll.u32 %v315, 16
    %v525 = vrot.slane %v523, 5
    %v526 = vor.u32 %v522, %v525
    %v527 = vrot.slane %v526, 4
    %v529 = vshll.u32 %v347, 16
    %v531 = vrot.slane %v529, 5
    %v532 = vsel %vm78, %v527, %v531
    %v534 = vshrl.u32 %v316, 16
    %v536 = vrot.slane %v534, 4
    %v537 = vshll.u32 %v316, 16
    %v539 = vrot.slane %v537, 5
    %v540 = vor.u32 %v536, %v539
    %v541 = vrot.slane %v540, 4
    %v543 = vshll.u32 %v348, 16
    %v545 = vrot.slane %v543, 5
    %v546 = vsel %vm78, %v541, %v545
    %v548 = vshrl.u32 %v317, 16
    %v550 = vrot.slane %v548, 4
    %v551 = vshll.u32 %v317, 16
    %v553 = vrot.slane %v551, 5
    %v554 = vor.u32 %v550, %v553
    %v555 = vrot.slane %v554, 4
    %v557 = vshll.u32 %v349, 16
    %v559 = vrot.slane %v557, 5
    %v560 = vsel %vm78, %v555, %v559
    %v562 = vshrl.u32 %v318, 16
    %v564 = vrot.slane %v562, 4
    %v565 = vshll.u32 %v318, 16
    %v567 = vrot.slane %v565, 5
    %v568 = vor.u32 %v564, %v567
    %v569 = vrot.slane %v568, 4
    %v571 = vshll.u32 %v350, 16
    %v573 = vrot.slane %v571, 5
    %v574 = vsel %vm78, %v569, %v573
    %s575 = scalar_lea.vmem %s0, 8
    %v576 = vld [vmem:[%s575] sm:$0xf]
    %v577 = vld [vmem:[%s575 + $0x8] sm:$0xf]
    %v578 = vld [vmem:[%s575 + $0x10] sm:$0xf]
    %v579 = vld [vmem:[%s575 + $0x18] sm:$0xf]
    %v580 = vld [vmem:[%s575 + $0x20] sm:$0xf]
    %v581 = vld [vmem:[%s575 + $0x28] sm:$0xf]
    %v582 = vld [vmem:[%s575 + $0x30] sm:$0xf]
    %v583 = vld [vmem:[%s575 + $0x38] sm:$0xf]
    %v584 = vld [vmem:[%s575 + $0x48] sm:$0xf]
    %v585 = vld [vmem:[%s575 + $0x50] sm:$0xf]
    %v586 = vld [vmem:[%s575 + $0x58] sm:$0xf]
    %v587 = vld [vmem:[%s575 + $0x60] sm:$0xf]
    %v588 = vld [vmem:[%s575 + $0x68] sm:$0xf]
    %v589 = vld [vmem:[%s575 + $0x70] sm:$0xf]
    %v590 = vld [vmem:[%s575 + $0x78] sm:$0xf]
    %v591 = vld [vmem:[%s575 + $0x80] sm:$0xf]
    %s592 = scalar_lea.vmem %s1, 8
    %v593 = vld [vmem:[%s592] sm:$0xf]
    %v594 = vld [vmem:[%s592 + $0x8] sm:$0xf]
    %v595 = vld [vmem:[%s592 + $0x10] sm:$0xf]
    %v596 = vld [vmem:[%s592 + $0x18] sm:$0xf]
    %v597 = vld [vmem:[%s592 + $0x20] sm:$0xf]
    %v598 = vld [vmem:[%s592 + $0x28] sm:$0xf]
    %v599 = vld [vmem:[%s592 + $0x30] sm:$0xf]
    %v600 = vld [vmem:[%s592 + $0x38] sm:$0xf]
    %v601 = vld [vmem:[%s592 + $0x48] sm:$0xf]
    %v602 = vld [vmem:[%s592 + $0x50] sm:$0xf]
    %v603 = vld [vmem:[%s592 + $0x58] sm:$0xf]
    %v604 = vld [vmem:[%s592 + $0x60] sm:$0xf]
    %v605 = vld [vmem:[%s592 + $0x68] sm:$0xf]
    %v606 = vld [vmem:[%s592 + $0x70] sm:$0xf]
    %v607 = vld [vmem:[%s592 + $0x78] sm:$0xf]
    %v608 = vld [vmem:[%s592 + $0x80] sm:$0xf]
    %v609 = vld [vmem:[%s575 + $0x4] sm:$0x1]
    %v610 = vld [vmem:[%s575 + $0xc] sm:$0x1]
    %v611 = vld [vmem:[%s575 + $0x14] sm:$0x1]
    %v612 = vld [vmem:[%s575 + $0x1c] sm:$0x1]
    %v613 = vld [vmem:[%s575 + $0x24] sm:$0x1]
    %v614 = vld [vmem:[%s575 + $0x2c] sm:$0x1]
    %v615 = vld [vmem:[%s575 + $0x34] sm:$0x1]
    %v616 = vld [vmem:[%s575 + $0x3c] sm:$0x1]
    %v617 = vld [vmem:[%s575 + $0x4c] sm:$0x1]
    %v618 = vld [vmem:[%s575 + $0x54] sm:$0x1]
    %v619 = vld [vmem:[%s575 + $0x5c] sm:$0x1]
    %v620 = vld [vmem:[%s575 + $0x64] sm:$0x1]
    %v621 = vld [vmem:[%s575 + $0x6c] sm:$0x1]
    %v622 = vld [vmem:[%s575 + $0x74] sm:$0x1]
    %v623 = vld [vmem:[%s575 + $0x7c] sm:$0x1]
    %v624 = vld [vmem:[%s575 + $0x84] sm:$0x1]
    %v626 = vshrl.u32 %v576, 16
    %v628 = vrot.slane %v626, 4
    %v629 = vshll.u32 %v576, 16
    %v631 = vrot.slane %v629, 5
    %v632 = vor.u32 %v628, %v631
    %v633 = vrot.slane %v632, 4
    %v635 = vshll.u32 %v609, 16
    %v637 = vrot.slane %v635, 5
    %v638 = vsel %vm78, %v633, %v637
    %v640 = vshrl.u32 %v577, 16
    %v642 = vrot.slane %v640, 4
    %v643 = vshll.u32 %v577, 16
    %v645 = vrot.slane %v643, 5
    %v646 = vor.u32 %v642, %v645
    %v647 = vrot.slane %v646, 4
    %v649 = vshll.u32 %v610, 16
    %v651 = vrot.slane %v649, 5
    %v652 = vsel %vm78, %v647, %v651
    %v654 = vshrl.u32 %v578, 16
    %v656 = vrot.slane %v654, 4
    %v657 = vshll.u32 %v578, 16
    %v659 = vrot.slane %v657, 5
    %v660 = vor.u32 %v656, %v659
    %v661 = vrot.slane %v660, 4
    %v663 = vshll.u32 %v611, 16
    %v665 = vrot.slane %v663, 5
    %v666 = vsel %vm78, %v661, %v665
    %v668 = vshrl.u32 %v579, 16
    %v670 = vrot.slane %v668, 4
    %v671 = vshll.u32 %v579, 16
    %v673 = vrot.slane %v671, 5
    %v674 = vor.u32 %v670, %v673
    %v675 = vrot.slane %v674, 4
    %v677 = vshll.u32 %v612, 16
    %v679 = vrot.slane %v677, 5
    %v680 = vsel %vm78, %v675, %v679
    %v682 = vshrl.u32 %v580, 16
    %v684 = vrot.slane %v682, 4
    %v685 = vshll.u32 %v580, 16
    %v687 = vrot.slane %v685, 5
    %v688 = vor.u32 %v684, %v687
    %v689 = vrot.slane %v688, 4
    %v691 = vshll.u32 %v613, 16
    %v693 = vrot.slane %v691, 5
    %v694 = vsel %vm78, %v689, %v693
    %v696 = vshrl.u32 %v581, 16
    %v698 = vrot.slane %v696, 4
    %v699 = vshll.u32 %v581, 16
    %v701 = vrot.slane %v699, 5
    %v702 = vor.u32 %v698, %v701
    %v703 = vrot.slane %v702, 4
    %v705 = vshll.u32 %v614, 16
    %v707 = vrot.slane %v705, 5
    %v708 = vsel %vm78, %v703, %v707
    %v710 = vshrl.u32 %v582, 16
    %v712 = vrot.slane %v710, 4
    %v713 = vshll.u32 %v582, 16
    %v715 = vrot.slane %v713, 5
    %v716 = vor.u32 %v712, %v715
    %v717 = vrot.slane %v716, 4
    %v719 = vshll.u32 %v615, 16
    %v721 = vrot.slane %v719, 5
    %v722 = vsel %vm78, %v717, %v721
    %v724 = vshrl.u32 %v583, 16
    %v726 = vrot.slane %v724, 4
    %v727 = vshll.u32 %v583, 16
    %v729 = vrot.slane %v727, 5
    %v730 = vor.u32 %v726, %v729
    %v731 = vrot.slane %v730, 4
    %v733 = vshll.u32 %v616, 16
    %v735 = vrot.slane %v733, 5
    %v736 = vsel %vm78, %v731, %v735
    %v738 = vshrl.u32 %v584, 16
    %v740 = vrot.slane %v738, 4
    %v741 = vshll.u32 %v584, 16
    %v743 = vrot.slane %v741, 5
    %v744 = vor.u32 %v740, %v743
    %v745 = vrot.slane %v744, 4
    %v747 = vshll.u32 %v617, 16
    %v749 = vrot.slane %v747, 5
    %v750 = vsel %vm78, %v745, %v749
    %v752 = vshrl.u32 %v585, 16
    %v754 = vrot.slane %v752, 4
    %v755 = vshll.u32 %v585, 16
    %v757 = vrot.slane %v755, 5
    %v758 = vor.u32 %v754, %v757
    %v759 = vrot.slane %v758, 4
    %v761 = vshll.u32 %v618, 16
    %v763 = vrot.slane %v761, 5
    %v764 = vsel %vm78, %v759, %v763
    %v766 = vshrl.u32 %v586, 16
    %v768 = vrot.slane %v766, 4
    %v769 = vshll.u32 %v586, 16
    %v771 = vrot.slane %v769, 5
    %v772 = vor.u32 %v768, %v771
    %v773 = vrot.slane %v772, 4
    %v775 = vshll.u32 %v619, 16
    %v777 = vrot.slane %v775, 5
    %v778 = vsel %vm78, %v773, %v777
    %v780 = vshrl.u32 %v587, 16
    %v782 = vrot.slane %v780, 4
    %v783 = vshll.u32 %v587, 16
    %v785 = vrot.slane %v783, 5
    %v786 = vor.u32 %v782, %v785
    %v787 = vrot.slane %v786, 4
    %v789 = vshll.u32 %v620, 16
    %v791 = vrot.slane %v789, 5
    %v792 = vsel %vm78, %v787, %v791
    %v794 = vshrl.u32 %v588, 16
    %v796 = vrot.slane %v794, 4
    %v797 = vshll.u32 %v588, 16
    %v799 = vrot.slane %v797, 5
    %v800 = vor.u32 %v796, %v799
    %v801 = vrot.slane %v800, 4
    %v803 = vshll.u32 %v621, 16
    %v805 = vrot.slane %v803, 5
    %v806 = vsel %vm78, %v801, %v805
    %v808 = vshrl.u32 %v589, 16
    %v810 = vrot.slane %v808, 4
    %v811 = vshll.u32 %v589, 16
    %v813 = vrot.slane %v811, 5
    %v814 = vor.u32 %v810, %v813
    %v815 = vrot.slane %v814, 4
    %v817 = vshll.u32 %v622, 16
    %v819 = vrot.slane %v817, 5
    %v820 = vsel %vm78, %v815, %v819
    %v822 = vshrl.u32 %v590, 16
    %v824 = vrot.slane %v822, 4
    %v825 = vshll.u32 %v590, 16
    %v827 = vrot.slane %v825, 5
    %v828 = vor.u32 %v824, %v827
    %v829 = vrot.slane %v828, 4
    %v831 = vshll.u32 %v623, 16
    %v833 = vrot.slane %v831, 5
    %v834 = vsel %vm78, %v829, %v833
    %v836 = vshrl.u32 %v591, 16
    %v838 = vrot.slane %v836, 4
    %v839 = vshll.u32 %v591, 16
    %v841 = vrot.slane %v839, 5
    %v842 = vor.u32 %v838, %v841
    %v843 = vrot.slane %v842, 4
    %v845 = vshll.u32 %v624, 16
    %v847 = vrot.slane %v845, 5
    %v848 = vsel %vm78, %v843, %v847
    %v865 = vunpack.c.l.b16 %v28
    %v866 = vunpack.c.l.b16 %v29
    %v867 = vunpack.c.l.b16 %v30
    %v868 = vunpack.c.l.b16 %v31
    %v869 = vunpack.c.l.b16 %v32
    %v870 = vunpack.c.l.b16 %v33
    %v871 = vunpack.c.l.b16 %v34
    %v872 = vunpack.c.l.b16 %v35
    %v873 = vunpack.c.l.b16 %v36
    %v874 = vunpack.c.l.b16 %v37
    %v875 = vunpack.c.l.b16 %v38
    %v876 = vunpack.c.l.b16 %v39
    %v877 = vunpack.c.l.b16 %v40
    %v878 = vunpack.c.l.b16 %v41
    %v879 = vunpack.c.l.b16 %v42
    %v880 = vunpack.c.l.b16 %v43
    %v881 = vpack.c.b16 %v866, %v865
    %v882 = vpack.c.b16 %v868, %v867
    %v883 = vpack.c.b16 %v870, %v869
    %v884 = vpack.c.b16 %v872, %v871
    %v885 = vpack.c.b16 %v874, %v873
    %v886 = vpack.c.b16 %v876, %v875
    %v887 = vpack.c.b16 %v878, %v877
    %v888 = vpack.c.b16 %v880, %v879
    %v905 = vunpack.c.l.b16 %v44
    %v906 = vunpack.c.l.b16 %v45
    %v907 = vunpack.c.l.b16 %v46
    %v908 = vunpack.c.l.b16 %v47
    %v909 = vunpack.c.l.b16 %v48
    %v910 = vunpack.c.l.b16 %v49
    %v911 = vunpack.c.l.b16 %v50
    %v912 = vunpack.c.l.b16 %v51
    %v913 = vunpack.c.l.b16 %v52
    %v914 = vunpack.c.l.b16 %v53
    %v915 = vunpack.c.l.b16 %v54
    %v916 = vunpack.c.l.b16 %v55
    %v917 = vunpack.c.l.b16 %v56
    %v918 = vunpack.c.l.b16 %v57
    %v919 = vunpack.c.l.b16 %v58
    %v920 = vunpack.c.l.b16 %v59
    %v921 = vpack.c.b16 %v906, %v905
    %v922 = vpack.c.b16 %v908, %v907
    %v923 = vpack.c.b16 %v910, %v909
    %v924 = vpack.c.b16 %v912, %v911
    %v925 = vpack.c.b16 %v914, %v913
    %v926 = vpack.c.b16 %v916, %v915
    %v927 = vpack.c.b16 %v918, %v917
    %v928 = vpack.c.b16 %v920, %v919
    %929 = vrot.lane.b32.xlu0 %v921, 64
    %v930 = vpop.permute.xlu0 %929
    %931 = vrot.lane.b32.xlu0 %v922, 64
    %v932 = vpop.permute.xlu0 %931
    %933 = vrot.lane.b32.xlu0 %v923, 64
    %v934 = vpop.permute.xlu0 %933
    %935 = vrot.lane.b32.xlu0 %v924, 64
    %v936 = vpop.permute.xlu0 %935
    %937 = vrot.lane.b32.xlu0 %v925, 64
    %v938 = vpop.permute.xlu0 %937
    %939 = vrot.lane.b32.xlu0 %v926, 64
    %v940 = vpop.permute.xlu0 %939
    %941 = vrot.lane.b32.xlu0 %v927, 64
    %v942 = vpop.permute.xlu0 %941
    %943 = vrot.lane.b32.xlu0 %v928, 64
    %v944 = vpop.permute.xlu0 %943
    %v945 = vunpack.c.l.b16 %v92
    %v946 = vunpack.c.l.b16 %v106
    %v947 = vunpack.c.l.b16 %v120
    %v948 = vunpack.c.l.b16 %v134
    %v949 = vunpack.c.l.b16 %v148
    %v950 = vunpack.c.l.b16 %v162
    %v951 = vunpack.c.l.b16 %v176
    %v952 = vunpack.c.l.b16 %v190
    %v953 = vunpack.c.l.b16 %v204
    %v954 = vunpack.c.l.b16 %v218
    %v955 = vunpack.c.l.b16 %v232
    %v956 = vunpack.c.l.b16 %v246
    %v957 = vunpack.c.l.b16 %v260
    %v958 = vunpack.c.l.b16 %v274
    %v959 = vunpack.c.l.b16 %v288
    %v960 = vunpack.c.l.b16 %v302
    %v961 = vpack.c.b16 %v946, %v945
    %v962 = vpack.c.b16 %v948, %v947
    %v963 = vpack.c.b16 %v950, %v949
    %v964 = vpack.c.b16 %v952, %v951
    %v965 = vpack.c.b16 %v954, %v953
    %v966 = vpack.c.b16 %v956, %v955
    %v967 = vpack.c.b16 %v958, %v957
    %v968 = vpack.c.b16 %v960, %v959
    %v985 = vunpack.c.l.b16 %v303
    %v986 = vunpack.c.l.b16 %v304
    %v987 = vunpack.c.l.b16 %v305
    %v988 = vunpack.c.l.b16 %v306
    %v989 = vunpack.c.l.b16 %v307
    %v990 = vunpack.c.l.b16 %v308
    %v991 = vunpack.c.l.b16 %v309
    %v992 = vunpack.c.l.b16 %v310
    %v993 = vunpack.c.l.b16 %v311
    %v994 = vunpack.c.l.b16 %v312
    %v995 = vunpack.c.l.b16 %v313
    %v996 = vunpack.c.l.b16 %v314
    %v997 = vunpack.c.l.b16 %v315
    %v998 = vunpack.c.l.b16 %v316
    %v999 = vunpack.c.l.b16 %v317
    %v1000 = vunpack.c.l.b16 %v318
    %v1001 = vpack.c.b16 %v986, %v985
    %v1002 = vpack.c.b16 %v988, %v987
    %v1003 = vpack.c.b16 %v990, %v989
    %v1004 = vpack.c.b16 %v992, %v991
    %v1005 = vpack.c.b16 %v994, %v993
    %v1006 = vpack.c.b16 %v996, %v995
    %v1007 = vpack.c.b16 %v998, %v997
    %v1008 = vpack.c.b16 %v1000, %v999
    %1009 = vrot.lane.b32.xlu0 %v1001, 64
    %v1010 = vpop.permute.xlu0 %1009
    %1011 = vrot.lane.b32.xlu0 %v1002, 64
    %v1012 = vpop.permute.xlu0 %1011
    %1013 = vrot.lane.b32.xlu0 %v1003, 64
    %v1014 = vpop.permute.xlu0 %1013
    %1015 = vrot.lane.b32.xlu0 %v1004, 64
    %v1016 = vpop.permute.xlu0 %1015
    %1017 = vrot.lane.b32.xlu0 %v1005, 64
    %v1018 = vpop.permute.xlu0 %1017
    %1019 = vrot.lane.b32.xlu0 %v1006, 64
    %v1020 = vpop.permute.xlu0 %1019
    %1021 = vrot.lane.b32.xlu0 %v1007, 64
    %v1022 = vpop.permute.xlu0 %1021
    %1023 = vrot.lane.b32.xlu0 %v1008, 64
    %v1024 = vpop.permute.xlu0 %1023
    %v1041 = vunpack.c.l.b16 %v319
    %v1042 = vunpack.c.l.b16 %v320
    %v1043 = vunpack.c.l.b16 %v321
    %v1044 = vunpack.c.l.b16 %v322
    %v1045 = vunpack.c.l.b16 %v323
    %v1046 = vunpack.c.l.b16 %v324
    %v1047 = vunpack.c.l.b16 %v325
    %v1048 = vunpack.c.l.b16 %v326
    %v1049 = vunpack.c.l.b16 %v327
    %v1050 = vunpack.c.l.b16 %v328
    %v1051 = vunpack.c.l.b16 %v329
    %v1052 = vunpack.c.l.b16 %v330
    %v1053 = vunpack.c.l.b16 %v331
    %v1054 = vunpack.c.l.b16 %v332
    %v1055 = vunpack.c.l.b16 %v333
    %v1056 = vunpack.c.l.b16 %v334
    %v1057 = vpack.c.b16 %v1042, %v1041
    %v1058 = vpack.c.b16 %v1044, %v1043
    %v1059 = vpack.c.b16 %v1046, %v1045
    %v1060 = vpack.c.b16 %v1048, %v1047
    %v1061 = vpack.c.b16 %v1050, %v1049
    %v1062 = vpack.c.b16 %v1052, %v1051
    %v1063 = vpack.c.b16 %v1054, %v1053
    %v1064 = vpack.c.b16 %v1056, %v1055
    %v1065 = vunpack.c.l.b16 %v364
    %v1066 = vunpack.c.l.b16 %v378
    %v1067 = vunpack.c.l.b16 %v392
    %v1068 = vunpack.c.l.b16 %v406
    %v1069 = vunpack.c.l.b16 %v420
    %v1070 = vunpack.c.l.b16 %v434
    %v1071 = vunpack.c.l.b16 %v448
    %v1072 = vunpack.c.l.b16 %v462
    %v1073 = vunpack.c.l.b16 %v476
    %v1074 = vunpack.c.l.b16 %v490
    %v1075 = vunpack.c.l.b16 %v504
    %v1076 = vunpack.c.l.b16 %v518
    %v1077 = vunpack.c.l.b16 %v532
    %v1078 = vunpack.c.l.b16 %v546
    %v1079 = vunpack.c.l.b16 %v560
    %v1080 = vunpack.c.l.b16 %v574
    %v1081 = vpack.c.b16 %v1066, %v1065
    %v1082 = vpack.c.b16 %v1068, %v1067
    %v1083 = vpack.c.b16 %v1070, %v1069
    %v1084 = vpack.c.b16 %v1072, %v1071
    %v1085 = vpack.c.b16 %v1074, %v1073
    %v1086 = vpack.c.b16 %v1076, %v1075
    %v1087 = vpack.c.b16 %v1078, %v1077
    %v1088 = vpack.c.b16 %v1080, %v1079
    %1089 = vrot.lane.b32.xlu0 %v1081, 64
    %v1090 = vpop.permute.xlu0 %1089
    %1091 = vrot.lane.b32.xlu0 %v1082, 64
    %v1092 = vpop.permute.xlu0 %1091
    %1093 = vrot.lane.b32.xlu0 %v1083, 64
    %v1094 = vpop.permute.xlu0 %1093
    %1095 = vrot.lane.b32.xlu0 %v1084, 64
    %v1096 = vpop.permute.xlu0 %1095
    %1097 = vrot.lane.b32.xlu0 %v1085, 64
    %v1098 = vpop.permute.xlu0 %1097
    %1099 = vrot.lane.b32.xlu0 %v1086, 64
    %v1100 = vpop.permute.xlu0 %1099
    %1101 = vrot.lane.b32.xlu0 %v1087, 64
    %v1102 = vpop.permute.xlu0 %1101
    %1103 = vrot.lane.b32.xlu0 %v1088, 64
    %v1104 = vpop.permute.xlu0 %1103
    %v1121 = vunpack.c.l.b16 %v576
    %v1122 = vunpack.c.l.b16 %v577
    %v1123 = vunpack.c.l.b16 %v578
    %v1124 = vunpack.c.l.b16 %v579
    %v1125 = vunpack.c.l.b16 %v580
    %v1126 = vunpack.c.l.b16 %v581
    %v1127 = vunpack.c.l.b16 %v582
    %v1128 = vunpack.c.l.b16 %v583
    %v1129 = vunpack.c.l.b16 %v584
    %v1130 = vunpack.c.l.b16 %v585
    %v1131 = vunpack.c.l.b16 %v586
    %v1132 = vunpack.c.l.b16 %v587
    %v1133 = vunpack.c.l.b16 %v588
    %v1134 = vunpack.c.l.b16 %v589
    %v1135 = vunpack.c.l.b16 %v590
    %v1136 = vunpack.c.l.b16 %v591
    %v1137 = vpack.c.b16 %v1122, %v1121
    %v1138 = vpack.c.b16 %v1124, %v1123
    %v1139 = vpack.c.b16 %v1126, %v1125
    %v1140 = vpack.c.b16 %v1128, %v1127
    %v1141 = vpack.c.b16 %v1130, %v1129
    %v1142 = vpack.c.b16 %v1132, %v1131
    %v1143 = vpack.c.b16 %v1134, %v1133
    %v1144 = vpack.c.b16 %v1136, %v1135
    %v1161 = vunpack.c.l.b16 %v593
    %v1162 = vunpack.c.l.b16 %v594
    %v1163 = vunpack.c.l.b16 %v595
    %v1164 = vunpack.c.l.b16 %v596
    %v1165 = vunpack.c.l.b16 %v597
    %v1166 = vunpack.c.l.b16 %v598
    %v1167 = vunpack.c.l.b16 %v599
    %v1168 = vunpack.c.l.b16 %v600
    %v1169 = vunpack.c.l.b16 %v601
    %v1170 = vunpack.c.l.b16 %v602
    %v1171 = vunpack.c.l.b16 %v603
    %v1172 = vunpack.c.l.b16 %v604
    %v1173 = vunpack.c.l.b16 %v605
    %v1174 = vunpack.c.l.b16 %v606
    %v1175 = vunpack.c.l.b16 %v607
    %v1176 = vunpack.c.l.b16 %v608
    %v1177 = vpack.c.b16 %v1162, %v1161
    %v1178 = vpack.c.b16 %v1164, %v1163
    %v1179 = vpack.c.b16 %v1166, %v1165
    %v1180 = vpack.c.b16 %v1168, %v1167
    %v1181 = vpack.c.b16 %v1170, %v1169
    %v1182 = vpack.c.b16 %v1172, %v1171
    %v1183 = vpack.c.b16 %v1174, %v1173
    %v1184 = vpack.c.b16 %v1176, %v1175
    %1185 = vrot.lane.b32.xlu0 %v1177, 64
    %v1186 = vpop.permute.xlu0 %1185
    %1187 = vrot.lane.b32.xlu0 %v1178, 64
    %v1188 = vpop.permute.xlu0 %1187
    %1189 = vrot.lane.b32.xlu0 %v1179, 64
    %v1190 = vpop.permute.xlu0 %1189
    %1191 = vrot.lane.b32.xlu0 %v1180, 64
    %v1192 = vpop.permute.xlu0 %1191
    %1193 = vrot.lane.b32.xlu0 %v1181, 64
    %v1194 = vpop.permute.xlu0 %1193
    %1195 = vrot.lane.b32.xlu0 %v1182, 64
    %v1196 = vpop.permute.xlu0 %1195
    %1197 = vrot.lane.b32.xlu0 %v1183, 64
    %v1198 = vpop.permute.xlu0 %1197
    %1199 = vrot.lane.b32.xlu0 %v1184, 64
    %v1200 = vpop.permute.xlu0 %1199
    %v1201 = vunpack.c.l.b16 %v638
    %v1202 = vunpack.c.l.b16 %v652
    %v1203 = vunpack.c.l.b16 %v666
    %v1204 = vunpack.c.l.b16 %v680
    %v1205 = vunpack.c.l.b16 %v694
    %v1206 = vunpack.c.l.b16 %v708
    %v1207 = vunpack.c.l.b16 %v722
    %v1208 = vunpack.c.l.b16 %v736
    %v1209 = vunpack.c.l.b16 %v750
    %v1210 = vunpack.c.l.b16 %v764
    %v1211 = vunpack.c.l.b16 %v778
    %v1212 = vunpack.c.l.b16 %v792
    %v1213 = vunpack.c.l.b16 %v806
    %v1214 = vunpack.c.l.b16 %v820
    %v1215 = vunpack.c.l.b16 %v834
    %v1216 = vunpack.c.l.b16 %v848
    %v1217 = vpack.c.b16 %v1202, %v1201
    %v1218 = vpack.c.b16 %v1204, %v1203
    %v1219 = vpack.c.b16 %v1206, %v1205
    %v1220 = vpack.c.b16 %v1208, %v1207
    %v1221 = vpack.c.b16 %v1210, %v1209
    %v1222 = vpack.c.b16 %v1212, %v1211
    %v1223 = vpack.c.b16 %v1214, %v1213
    %v1224 = vpack.c.b16 %v1216, %v1215
    %vm1225 = vcmask 523264
    %v1228 = vsel %vm1225, %v881, %v930
    %v1232 = vsel %vm1225, %v882, %v932
    %v1236 = vsel %vm1225, %v883, %v934
    %v1240 = vsel %vm1225, %v884, %v936
    %v1244 = vsel %vm1225, %v885, %v938
    %v1248 = vsel %vm1225, %v886, %v940
    %v1252 = vsel %vm1225, %v887, %v942
    %v1256 = vsel %vm1225, %v888, %v944
    %v1260 = vsel %vm1225, %v961, %v1010
    %v1264 = vsel %vm1225, %v962, %v1012
    %v1268 = vsel %vm1225, %v963, %v1014
    %v1272 = vsel %vm1225, %v964, %v1016
    %v1276 = vsel %vm1225, %v965, %v1018
    %v1280 = vsel %vm1225, %v966, %v1020
    %v1284 = vsel %vm1225, %v967, %v1022
    %v1288 = vsel %vm1225, %v968, %v1024
    %v1292 = vsel %vm1225, %v1057, %v1090
    %v1296 = vsel %vm1225, %v1058, %v1092
    %v1300 = vsel %vm1225, %v1059, %v1094
    %v1304 = vsel %vm1225, %v1060, %v1096
    %v1308 = vsel %vm1225, %v1061, %v1098
    %v1312 = vsel %vm1225, %v1062, %v1100
    %v1316 = vsel %vm1225, %v1063, %v1102
    %v1320 = vsel %vm1225, %v1064, %v1104
    %v1324 = vsel %vm1225, %v1137, %v1186
    %v1328 = vsel %vm1225, %v1138, %v1188
    %v1332 = vsel %vm1225, %v1139, %v1190
    %v1336 = vsel %vm1225, %v1140, %v1192
    %v1340 = vsel %vm1225, %v1141, %v1194
    %v1344 = vsel %vm1225, %v1142, %v1196
    %v1348 = vsel %vm1225, %v1143, %v1198
    %v1352 = vsel %vm1225, %v1144, %v1200
    %v1354 = vld [vmem:[%s4] sm:$0xf]
    %v1355 = vld [vmem:[%s4 + $0x4] sm:$0xf]
    %v1356 = vld [vmem:[%s4 + $0x8] sm:$0xf]
    %v1357 = vld [vmem:[%s4 + $0xc] sm:$0xf]
    %v1358 = vld [vmem:[%s4 + $0x10] sm:$0xf]
    %v1359 = vld [vmem:[%s4 + $0x14] sm:$0xf]
    %v1360 = vld [vmem:[%s4 + $0x18] sm:$0xf]
    %v1361 = vld [vmem:[%s4 + $0x1c] sm:$0xf]
    %v1362 = vld [vmem:[%s4 + $0x20] sm:$0xf]
    %v1363 = vld [vmem:[%s4 + $0x24] sm:$0xf]
    %v1364 = vld [vmem:[%s4 + $0x28] sm:$0xf]
    %v1365 = vld [vmem:[%s4 + $0x2c] sm:$0xf]
    %v1366 = vld [vmem:[%s4 + $0x30] sm:$0xf]
    %v1367 = vld [vmem:[%s4 + $0x34] sm:$0xf]
    %v1368 = vld [vmem:[%s4 + $0x38] sm:$0xf]
    %v1369 = vld [vmem:[%s4 + $0x3c] sm:$0xf]
    %v1370 = vld [vmem:[%s4 + $0x40] sm:$0xf]
    %v1371 = vld [vmem:[%s4 + $0x44] sm:$0xf]
    %v1372 = vld [vmem:[%s4 + $0x48] sm:$0xf]
    %v1373 = vld [vmem:[%s4 + $0x4c] sm:$0xf]
    %v1374 = vld [vmem:[%s4 + $0x50] sm:$0xf]
    %v1375 = vld [vmem:[%s4 + $0x54] sm:$0xf]
    %v1376 = vld [vmem:[%s4 + $0x58] sm:$0xf]
    %v1377 = vld [vmem:[%s4 + $0x5c] sm:$0xf]
    %v1378 = vld [vmem:[%s4 + $0x60] sm:$0xf]
    %v1379 = vld [vmem:[%s4 + $0x64] sm:$0xf]
    %v1380 = vld [vmem:[%s4 + $0x68] sm:$0xf]
    %v1381 = vld [vmem:[%s4 + $0x6c] sm:$0xf]
    %v1382 = vld [vmem:[%s4 + $0x70] sm:$0xf]
    %v1383 = vld [vmem:[%s4 + $0x74] sm:$0xf]
    %v1384 = vld [vmem:[%s4 + $0x78] sm:$0xf]
    %v1385 = vld [vmem:[%s4 + $0x7c] sm:$0xf]
    %v1386 = vld [vmem:[%s4 + $0x80] sm:$0xf]
    %v1387 = vld [vmem:[%s4 + $0x84] sm:$0xf]
    %v1388 = vld [vmem:[%s4 + $0x88] sm:$0xf]
    %v1389 = vld [vmem:[%s4 + $0x8c] sm:$0xf]
    %v1390 = vld [vmem:[%s4 + $0x90] sm:$0xf]
    %v1391 = vld [vmem:[%s4 + $0x94] sm:$0xf]
    %v1392 = vld [vmem:[%s4 + $0x98] sm:$0xf]
    %v1393 = vld [vmem:[%s4 + $0x9c] sm:$0xf]
    %v1394 = vld [vmem:[%s4 + $0xa0] sm:$0xf]
    %v1395 = vld [vmem:[%s4 + $0xa4] sm:$0xf]
    %v1396 = vld [vmem:[%s4 + $0xa8] sm:$0xf]
    %v1397 = vld [vmem:[%s4 + $0xac] sm:$0xf]
    %v1398 = vld [vmem:[%s4 + $0xb0] sm:$0xf]
    %v1399 = vld [vmem:[%s4 + $0xb4] sm:$0xf]
    %v1400 = vld [vmem:[%s4 + $0xb8] sm:$0xf]
    %v1401 = vld [vmem:[%s4 + $0xbc] sm:$0xf]
    %v1402 = vld [vmem:[%s4 + $0xc0] sm:$0xf]
    %v1403 = vld [vmem:[%s4 + $0xc4] sm:$0xf]
    %v1404 = vld [vmem:[%s4 + $0xc8] sm:$0xf]
    %v1405 = vld [vmem:[%s4 + $0xcc] sm:$0xf]
    %v1406 = vld [vmem:[%s4 + $0xd0] sm:$0xf]
    %v1407 = vld [vmem:[%s4 + $0xd4] sm:$0xf]
    %v1408 = vld [vmem:[%s4 + $0xd8] sm:$0xf]
    %v1409 = vld [vmem:[%s4 + $0xdc] sm:$0xf]
    %v1410 = vld [vmem:[%s4 + $0xe0] sm:$0xf]
    %v1411 = vld [vmem:[%s4 + $0xe4] sm:$0xf]
    %v1412 = vld [vmem:[%s4 + $0xe8] sm:$0xf]
    %v1413 = vld [vmem:[%s4 + $0xec] sm:$0xf]
    %v1414 = vld [vmem:[%s4 + $0xf0] sm:$0xf]
    %v1415 = vld [vmem:[%s4 + $0xf4] sm:$0xf]
    %v1416 = vld [vmem:[%s4 + $0xf8] sm:$0xf]
    %v1417 = vld [vmem:[%s4 + $0xfc] sm:$0xf]
    %v1418 = vld [vmem:[%s4 + $0x100] sm:$0xf]
    %v1419 = vld [vmem:[%s4 + $0x104] sm:$0xf]
    %v1420 = vld [vmem:[%s4 + $0x108] sm:$0xf]
    %v1421 = vld [vmem:[%s4 + $0x10c] sm:$0xf]
    %v1422 = vld [vmem:[%s4 + $0x110] sm:$0xf]
    %v1423 = vld [vmem:[%s4 + $0x114] sm:$0xf]
    %v1424 = vld [vmem:[%s4 + $0x118] sm:$0xf]
    %v1425 = vld [vmem:[%s4 + $0x11c] sm:$0xf]
    %v1498 = vunpack.c.l.b16 %v1354
    %v1499 = vunpack.c.l.b16 %v1355
    %v1500 = vunpack.c.l.b16 %v1356
    %v1501 = vunpack.c.l.b16 %v1357
    %v1502 = vunpack.c.l.b16 %v1358
    %v1503 = vunpack.c.l.b16 %v1359
    %v1504 = vunpack.c.l.b16 %v1360
    %v1505 = vunpack.c.l.b16 %v1361
    %v1506 = vunpack.c.l.b16 %v1362
    %v1507 = vunpack.c.l.b16 %v1363
    %v1508 = vunpack.c.l.b16 %v1364
    %v1509 = vunpack.c.l.b16 %v1365
    %v1510 = vunpack.c.l.b16 %v1366
    %v1511 = vunpack.c.l.b16 %v1367
    %v1512 = vunpack.c.l.b16 %v1368
    %v1513 = vunpack.c.l.b16 %v1369
    %v1514 = vunpack.c.l.b16 %v1370
    %v1515 = vunpack.c.l.b16 %v1371
    %v1516 = vunpack.c.l.b16 %v1372
    %v1517 = vunpack.c.l.b16 %v1373
    %v1518 = vunpack.c.l.b16 %v1374
    %v1519 = vunpack.c.l.b16 %v1375
    %v1520 = vunpack.c.l.b16 %v1376
    %v1521 = vunpack.c.l.b16 %v1377
    %v1522 = vunpack.c.l.b16 %v1378
    %v1523 = vunpack.c.l.b16 %v1379
    %v1524 = vunpack.c.l.b16 %v1380
    %v1525 = vunpack.c.l.b16 %v1381
    %v1526 = vunpack.c.l.b16 %v1382
    %v1527 = vunpack.c.l.b16 %v1383
    %v1528 = vunpack.c.l.b16 %v1384
    %v1529 = vunpack.c.l.b16 %v1385
    %v1530 = vunpack.c.l.b16 %v1386
    %v1531 = vunpack.c.l.b16 %v1387
    %v1532 = vunpack.c.l.b16 %v1388
    %v1533 = vunpack.c.l.b16 %v1389
    %v1534 = vunpack.c.l.b16 %v1390
    %v1535 = vunpack.c.l.b16 %v1391
    %v1536 = vunpack.c.l.b16 %v1392
    %v1537 = vunpack.c.l.b16 %v1393
    %v1538 = vunpack.c.l.b16 %v1394
    %v1539 = vunpack.c.l.b16 %v1395
    %v1540 = vunpack.c.l.b16 %v1396
    %v1541 = vunpack.c.l.b16 %v1397
    %v1542 = vunpack.c.l.b16 %v1398
    %v1543 = vunpack.c.l.b16 %v1399
    %v1544 = vunpack.c.l.b16 %v1400
    %v1545 = vunpack.c.l.b16 %v1401
    %v1546 = vunpack.c.l.b16 %v1402
    %v1547 = vunpack.c.l.b16 %v1403
    %v1548 = vunpack.c.l.b16 %v1404
    %v1549 = vunpack.c.l.b16 %v1405
    %v1550 = vunpack.c.l.b16 %v1406
    %v1551 = vunpack.c.l.b16 %v1407
    %v1552 = vunpack.c.l.b16 %v1408
    %v1553 = vunpack.c.l.b16 %v1409
    %v1554 = vunpack.c.l.b16 %v1410
    %v1555 = vunpack.c.l.b16 %v1411
    %v1556 = vunpack.c.l.b16 %v1412
    %v1557 = vunpack.c.l.b16 %v1413
    %v1558 = vunpack.c.l.b16 %v1414
    %v1559 = vunpack.c.l.b16 %v1415
    %v1560 = vunpack.c.l.b16 %v1416
    %v1561 = vunpack.c.l.b16 %v1417
    %v1562 = vunpack.c.l.b16 %v1418
    %v1563 = vunpack.c.l.b16 %v1419
    %v1564 = vunpack.c.l.b16 %v1420
    %v1565 = vunpack.c.l.b16 %v1421
    %v1566 = vunpack.c.l.b16 %v1422
    %v1567 = vunpack.c.l.b16 %v1423
    %v1568 = vunpack.c.l.b16 %v1424
    %v1569 = vunpack.c.l.b16 %v1425
    %v1570 = vpack.c.b16 %v1499, %v1498
    %v1571 = vpack.c.b16 %v1501, %v1500
    %v1572 = vpack.c.b16 %v1503, %v1502
    %v1573 = vpack.c.b16 %v1505, %v1504
    %v1574 = vpack.c.b16 %v1507, %v1506
    %v1575 = vpack.c.b16 %v1509, %v1508
    %v1576 = vpack.c.b16 %v1511, %v1510
    %v1577 = vpack.c.b16 %v1513, %v1512
    %v1578 = vpack.c.b16 %v1515, %v1514
    %v1579 = vpack.c.b16 %v1517, %v1516
    %v1580 = vpack.c.b16 %v1519, %v1518
    %v1581 = vpack.c.b16 %v1521, %v1520
    %v1582 = vpack.c.b16 %v1523, %v1522
    %v1583 = vpack.c.b16 %v1525, %v1524
    %v1584 = vpack.c.b16 %v1527, %v1526
    %v1585 = vpack.c.b16 %v1529, %v1528
    %v1586 = vpack.c.b16 %v1531, %v1530
    %v1587 = vpack.c.b16 %v1533, %v1532
    %v1588 = vpack.c.b16 %v1535, %v1534
    %v1589 = vpack.c.b16 %v1537, %v1536
    %v1590 = vpack.c.b16 %v1539, %v1538
    %v1591 = vpack.c.b16 %v1541, %v1540
    %v1592 = vpack.c.b16 %v1543, %v1542
    %v1593 = vpack.c.b16 %v1545, %v1544
    %v1594 = vpack.c.b16 %v1547, %v1546
    %v1595 = vpack.c.b16 %v1549, %v1548
    %v1596 = vpack.c.b16 %v1551, %v1550
    %v1597 = vpack.c.b16 %v1553, %v1552
    %v1598 = vpack.c.b16 %v1555, %v1554
    %v1599 = vpack.c.b16 %v1557, %v1556
    %v1600 = vpack.c.b16 %v1559, %v1558
    %v1601 = vpack.c.b16 %v1561, %v1560
    %v1602 = vpack.c.b16 %v1563, %v1562
    %v1603 = vpack.c.b16 %v1565, %v1564
    %v1604 = vpack.c.b16 %v1567, %v1566
    %v1605 = vpack.c.b16 %v1569, %v1568
    %v1643 = vsel %vm1225, %v1217, 0
    %v1646 = vsel %vm1225, %v1218, 0
    %v1649 = vsel %vm1225, %v1219, 0
    %v1652 = vsel %vm1225, %v1220, 0
    %v1655 = vsel %vm1225, %v1221, 0
    %v1658 = vsel %vm1225, %v1222, 0
    %v1661 = vsel %vm1225, %v1223, 0
    %v1664 = vsel %vm1225, %v1224, 0
    %1666 = vmatprep.subr.bf16.mxu0 0
    %1667 = vmatpush1.bf16.msra.mxu0 %v1570
    %1668 = vmatprep.subr.bf16.mxu0 0
    %1669 = vmatpush1.bf16.msra.mxu0 %v1571
    %1670 = vmatprep.subr.bf16.mxu0 0
    %1671 = vmatpush1.bf16.msra.mxu0 %v1572
    %1672 = vmatprep.subr.bf16.mxu0 0
    %1673 = vmatpush1.bf16.msra.mxu0 %v1573
    %1674 = vmatprep.subr.bf16.mxu0 0
    %1675 = vmatpush1.bf16.msra.mxu0 %v1574
    %1676 = vmatprep.subr.bf16.mxu0 0
    %1677 = vmatpush1.bf16.msra.mxu0 %v1575
    %1678 = vmatprep.subr.bf16.mxu0 0
    %1679 = vmatpush1.bf16.msra.mxu0 %v1576
    %1680 = vmatprep.subr.bf16.mxu0 0
    %1681 = vmatpush1.bf16.msra.mxu0 %v1577
    %1682 = vmatprep.subr.bf16.mxu0 0
    %1683 = vmatpush1.bf16.msra.mxu0 %v1578
    %1684 = vmatprep.subr.bf16.mxu0 0
    %1685 = vmatpush1.bf16.msra.mxu0 %v1579
    %1686 = vmatprep.subr.bf16.mxu0 0
    %1687 = vmatpush1.bf16.msra.mxu0 %v1580
    %1688 = vmatprep.subr.bf16.mxu0 0
    %1689 = vmatpush1.bf16.msra.mxu0 %v1581
    %1690 = vmatprep.subr.bf16.mxu0 0
    %1691 = vmatpush1.bf16.msra.mxu0 %v1582
    %1692 = vmatprep.subr.bf16.mxu0 0
    %1693 = vmatpush1.bf16.msra.mxu0 %v1583
    %1694 = vmatprep.subr.bf16.mxu0 0
    %1695 = vmatpush1.bf16.msra.mxu0 %v1584
    %1696 = vmatprep.subr.bf16.mxu0 0
    %1697 = vmatpush1.bf16.msra.mxu0 %v1585
    %1698 = vmatprep.mubr.bf16.mxu0 %v1260
    %1699 = vmatmul.mubr.bf16.gmra.mrb[0].mxu0 %v1228
    %v1700 = vpop.f32.mrb[0].mxu0
    %v1701 = vadd.f32 0.0, %v1700
    %v1702 = vpop.f32.mrb[0].mxu0
    %v1703 = vpop.f32.mrb[0].mxu0
    %v1704 = vadd.f32 0.0, %v1703
    %v1705 = vpop.f32.mrb[0].mxu0
    %1706 = vmatprep.mubr.bf16.mxu0 %v1264
    %1707 = vmatmul.mubr.bf16.gmra.mrb[0].mxu0 %v1232
    %v1708 = vpop.f32.mrb[0].mxu0
    %v1709 = vadd.f32 0.0, %v1708
    %v1710 = vpop.f32.mrb[0].mxu0
    %v1711 = vpop.f32.mrb[0].mxu0
    %v1712 = vadd.f32 0.0, %v1711
    %v1713 = vpop.f32.mrb[0].mxu0
    %1714 = vmatprep.mubr.bf16.mxu0 %v1268
    %1715 = vmatmul.mubr.bf16.gmra.mrb[0].mxu0 %v1236
    %v1716 = vpop.f32.mrb[0].mxu0
    %v1717 = vadd.f32 0.0, %v1716
    %v1718 = vpop.f32.mrb[0].mxu0
    %v1719 = vpop.f32.mrb[0].mxu0
    %v1720 = vadd.f32 0.0, %v1719
    %v1721 = vpop.f32.mrb[0].mxu0
    %1722 = vmatprep.mubr.bf16.mxu0 %v1272
    %1723 = vmatmul.mubr.bf16.gmra.mrb[0].mxu0 %v1240
    %v1724 = vpop.f32.mrb[0].mxu0
    %v1725 = vadd.f32 0.0, %v1724
    %v1726 = vpop.f32.mrb[0].mxu0
    %v1727 = vpop.f32.mrb[0].mxu0
    %v1728 = vadd.f32 0.0, %v1727
    %v1729 = vpop.f32.mrb[0].mxu0
    %1730 = vmatprep.mubr.bf16.mxu0 %v1276
    %1731 = vmatmul.mubr.bf16.gmra.mrb[0].mxu0 %v1244
    %v1732 = vpop.f32.mrb[0].mxu0
    %v1733 = vadd.f32 0.0, %v1732
    %v1734 = vpop.f32.mrb[0].mxu0
    %v1735 = vpop.f32.mrb[0].mxu0
    %v1736 = vadd.f32 0.0, %v1735
    %v1737 = vpop.f32.mrb[0].mxu0
    %1738 = vmatprep.mubr.bf16.mxu0 %v1280
    %1739 = vmatmul.mubr.bf16.gmra.mrb[0].mxu0 %v1248
    %v1740 = vpop.f32.mrb[0].mxu0
    %v1741 = vadd.f32 0.0, %v1740
    %v1742 = vpop.f32.mrb[0].mxu0
    %v1743 = vpop.f32.mrb[0].mxu0
    %v1744 = vadd.f32 0.0, %v1743
    %v1745 = vpop.f32.mrb[0].mxu0
    %1746 = vmatprep.mubr.bf16.mxu0 %v1284
    %1747 = vmatmul.mubr.bf16.gmra.mrb[0].mxu0 %v1252
    %v1748 = vpop.f32.mrb[0].mxu0
    %v1749 = vadd.f32 0.0, %v1748
    %v1750 = vpop.f32.mrb[0].mxu0
    %v1751 = vpop.f32.mrb[0].mxu0
    %v1752 = vadd.f32 0.0, %v1751
    %v1753 = vpop.f32.mrb[0].mxu0
    %1754 = vmatprep.mubr.bf16.mxu0 %v1288
    %1755 = vmatmul.mubr.bf16.gmra.mrb[0].mxu0 %v1256
    %v1756 = vpop.f32.mrb[0].mxu0
    %v1757 = vadd.f32 0.0, %v1756
    %v1758 = vpop.f32.mrb[0].mxu0
    %v1759 = vpop.f32.mrb[0].mxu0
    %v1760 = vadd.f32 0.0, %v1759
    %v1761 = vpop.f32.mrb[0].mxu0
    %1762 = vdwg.mxu0
    %1763 = vmatprep.subr.bf16.mxu0 0
    %1764 = vmatpush1.bf16.msra.mxu0 %v1586
    %1765 = vmatprep.subr.bf16.mxu0 0
    %1766 = vmatpush1.bf16.msra.mxu0 %v1587
    %1767 = vmatprep.subr.bf16.mxu0 0
    %1768 = vmatpush1.bf16.msra.mxu0 %v1588
    %1769 = vmatprep.subr.bf16.mxu0 0
    %1770 = vmatpush1.bf16.msra.mxu0 %v1589
    %1771 = vmatprep.subr.bf16.mxu0 0
    %1772 = vmatpush1.bf16.msra.mxu0 %v1590
    %1773 = vmatprep.subr.bf16.mxu0 0
    %1774 = vmatpush1.bf16.msra.mxu0 %v1591
    %1775 = vmatprep.subr.bf16.mxu0 0
    %1776 = vmatpush1.bf16.msra.mxu0 %v1592
    %1777 = vmatprep.subr.bf16.mxu0 0
    %1778 = vmatpush1.bf16.msra.mxu0 %v1593
    %1779 = vmatprep.subr.bf16.mxu0 0
    %1780 = vmatpush1.bf16.msra.mxu0 %v1594
    %1781 = vmatprep.subr.bf16.mxu0 0
    %1782 = vmatpush1.bf16.msra.mxu0 %v1595
    %1783 = vmatprep.subr.bf16.mxu0 0
    %1784 = vmatpush1.bf16.msra.mxu0 %v1596
    %1785 = vmatprep.subr.bf16.mxu0 0
    %1786 = vmatpush1.bf16.msra.mxu0 %v1597
    %1787 = vmatprep.subr.bf16.mxu0 0
    %1788 = vmatpush1.bf16.msra.mxu0 %v1598
    %1789 = vmatprep.subr.bf16.mxu0 0
    %1790 = vmatpush1.bf16.msra.mxu0 %v1599
    %1791 = vmatprep.subr.bf16.mxu0 0
    %1792 = vmatpush1.bf16.msra.mxu0 %v1600
    %1793 = vmatprep.subr.bf16.mxu0 0
    %1794 = vmatpush1.bf16.msra.mxu0 %v1601
    %1795 = vmatprep.mubr.bf16.mxu0 %v1324
    %1796 = vmatmul.mubr.bf16.gmra.mrb[0].mxu0 %v1292
    %v1797 = vpop.f32.mrb[0].mxu0
    %v1798 = vadd.f32 %v1701, %v1797
    %v1799 = vpop.f32.mrb[0].mxu0
    %v1800 = vpop.f32.mrb[0].mxu0
    %v1801 = vadd.f32 %v1704, %v1800
    %v1802 = vpop.f32.mrb[0].mxu0
    %1803 = vmatprep.mubr.bf16.mxu0 %v1328
    %1804 = vmatmul.mubr.bf16.gmra.mrb[0].mxu0 %v1296
    %v1805 = vpop.f32.mrb[0].mxu0
    %v1806 = vadd.f32 %v1709, %v1805
    %v1807 = vpop.f32.mrb[0].mxu0
    %v1808 = vpop.f32.mrb[0].mxu0
    %v1809 = vadd.f32 %v1712, %v1808
    %v1810 = vpop.f32.mrb[0].mxu0
    %1811 = vmatprep.mubr.bf16.mxu0 %v1332
    %1812 = vmatmul.mubr.bf16.gmra.mrb[0].mxu0 %v1300
    %v1813 = vpop.f32.mrb[0].mxu0
    %v1814 = vadd.f32 %v1717, %v1813
    %v1815 = vpop.f32.mrb[0].mxu0
    %v1816 = vpop.f32.mrb[0].mxu0
    %v1817 = vadd.f32 %v1720, %v1816
    %v1818 = vpop.f32.mrb[0].mxu0
    %1819 = vmatprep.mubr.bf16.mxu0 %v1336
    %1820 = vmatmul.mubr.bf16.gmra.mrb[0].mxu0 %v1304
    %v1821 = vpop.f32.mrb[0].mxu0
    %v1822 = vadd.f32 %v1725, %v1821
    %v1823 = vpop.f32.mrb[0].mxu0
    %v1824 = vpop.f32.mrb[0].mxu0
    %v1825 = vadd.f32 %v1728, %v1824
    %v1826 = vpop.f32.mrb[0].mxu0
    %1827 = vmatprep.mubr.bf16.mxu0 %v1340
    %1828 = vmatmul.mubr.bf16.gmra.mrb[0].mxu0 %v1308
    %v1829 = vpop.f32.mrb[0].mxu0
    %v1830 = vadd.f32 %v1733, %v1829
    %v1831 = vpop.f32.mrb[0].mxu0
    %v1832 = vpop.f32.mrb[0].mxu0
    %v1833 = vadd.f32 %v1736, %v1832
    %v1834 = vpop.f32.mrb[0].mxu0
    %1835 = vmatprep.mubr.bf16.mxu0 %v1344
    %1836 = vmatmul.mubr.bf16.gmra.mrb[0].mxu0 %v1312
    %v1837 = vpop.f32.mrb[0].mxu0
    %v1838 = vadd.f32 %v1741, %v1837
    %v1839 = vpop.f32.mrb[0].mxu0
    %v1840 = vpop.f32.mrb[0].mxu0
    %v1841 = vadd.f32 %v1744, %v1840
    %v1842 = vpop.f32.mrb[0].mxu0
    %1843 = vmatprep.mubr.bf16.mxu0 %v1348
    %1844 = vmatmul.mubr.bf16.gmra.mrb[0].mxu0 %v1316
    %v1845 = vpop.f32.mrb[0].mxu0
    %v1846 = vadd.f32 %v1749, %v1845
    %v1847 = vpop.f32.mrb[0].mxu0
    %v1848 = vpop.f32.mrb[0].mxu0
    %v1849 = vadd.f32 %v1752, %v1848
    %v1850 = vpop.f32.mrb[0].mxu0
    %1851 = vmatprep.mubr.bf16.mxu0 %v1352
    %1852 = vmatmul.mubr.bf16.gmra.mrb[0].mxu0 %v1320
    %v1853 = vpop.f32.mrb[0].mxu0
    %v1854 = vadd.f32 %v1757, %v1853
    %v1855 = vpop.f32.mrb[0].mxu0
    %v1856 = vpop.f32.mrb[0].mxu0
    %v1857 = vadd.f32 %v1760, %v1856
    %v1858 = vpop.f32.mrb[0].mxu0
    %1859 = vdwg.mxu0
    %1860 = vmatprep.subr.bf16.mxu0 0
    %1861 = vmatpush1.bf16.msra.mxu0 %v1602
    %1862 = vmatprep.subr.bf16.mxu0 0
    %1863 = vmatpush1.bf16.msra.mxu0 %v1603
    %1864 = vmatprep.subr.bf16.mxu0 0
    %1865 = vmatpush1.bf16.msra.mxu0 %v1604
    %1866 = vmatprep.subr.bf16.mxu0 0
    %1867 = vmatpush1.bf16.msra.mxu0 %v1605
    %1868 = vmatprep.subr.bf16.mxu0 0
    %1869 = vmatpush1.bf16.msra.mxu0 0
    %1870 = vmatprep.subr.bf16.mxu0 0
    %1871 = vmatpush1.bf16.msra.mxu0 0
    %1872 = vmatprep.subr.bf16.mxu0 0
    %1873 = vmatpush1.bf16.msra.mxu0 0
    %1874 = vmatprep.subr.bf16.mxu0 0
    %1875 = vmatpush1.bf16.msra.mxu0 0
    %1876 = vmatprep.subr.bf16.mxu0 0
    %1877 = vmatpush1.bf16.msra.mxu0 0
    %1878 = vmatprep.subr.bf16.mxu0 0
    %1879 = vmatpush1.bf16.msra.mxu0 0
    %1880 = vmatprep.subr.bf16.mxu0 0
    %1881 = vmatpush1.bf16.msra.mxu0 0
    %1882 = vmatprep.subr.bf16.mxu0 0
    %1883 = vmatpush1.bf16.msra.mxu0 0
    %1884 = vmatprep.subr.bf16.mxu0 0
    %1885 = vmatpush1.bf16.msra.mxu0 0
    %1886 = vmatprep.subr.bf16.mxu0 0
    %1887 = vmatpush1.bf16.msra.mxu0 0
    %1888 = vmatprep.subr.bf16.mxu0 0
    %1889 = vmatpush1.bf16.msra.mxu0 0
    %1890 = vmatprep.subr.bf16.mxu0 0
    %1891 = vmatpush1.bf16.msra.mxu0 0
    %1892 = vmatprep.mubr.bf16.mxu0 0
    %1893 = vmatmul.mubr.bf16.gmra.mrb[0].mxu0 %v1643
    %v1894 = vpop.f32.mrb[0].mxu0
    %v1895 = vadd.f32 %v1798, %v1894
    %v1896 = vpop.f32.mrb[0].mxu0
    %v1897 = vpop.f32.mrb[0].mxu0
    %v1898 = vadd.f32 %v1801, %v1897
    %v1899 = vpop.f32.mrb[0].mxu0
    %1900 = vmatprep.mubr.bf16.mxu0 0
    %1901 = vmatmul.mubr.bf16.gmra.mrb[0].mxu0 %v1646
    %v1902 = vpop.f32.mrb[0].mxu0
    %v1903 = vadd.f32 %v1806, %v1902
    %v1904 = vpop.f32.mrb[0].mxu0
    %v1905 = vpop.f32.mrb[0].mxu0
    %v1906 = vadd.f32 %v1809, %v1905
    %v1907 = vpop.f32.mrb[0].mxu0
    %1908 = vmatprep.mubr.bf16.mxu0 0
    %1909 = vmatmul.mubr.bf16.gmra.mrb[0].mxu0 %v1649
    %v1910 = vpop.f32.mrb[0].mxu0
    %v1911 = vadd.f32 %v1814, %v1910
    %v1912 = vpop.f32.mrb[0].mxu0
    %v1913 = vpop.f32.mrb[0].mxu0
    %v1914 = vadd.f32 %v1817, %v1913
    %v1915 = vpop.f32.mrb[0].mxu0
    %1916 = vmatprep.mubr.bf16.mxu0 0
    %1917 = vmatmul.mubr.bf16.gmra.mrb[0].mxu0 %v1652
    %v1918 = vpop.f32.mrb[0].mxu0
    %v1919 = vadd.f32 %v1822, %v1918
    %v1920 = vpop.f32.mrb[0].mxu0
    %v1921 = vpop.f32.mrb[0].mxu0
    %v1922 = vadd.f32 %v1825, %v1921
    %v1923 = vpop.f32.mrb[0].mxu0
    %1924 = vmatprep.mubr.bf16.mxu0 0
    %1925 = vmatmul.mubr.bf16.gmra.mrb[0].mxu0 %v1655
    %v1926 = vpop.f32.mrb[0].mxu0
    %v1927 = vadd.f32 %v1830, %v1926
    %v1928 = vpop.f32.mrb[0].mxu0
    %v1929 = vpop.f32.mrb[0].mxu0
    %v1930 = vadd.f32 %v1833, %v1929
    %v1931 = vpop.f32.mrb[0].mxu0
    %1932 = vmatprep.mubr.bf16.mxu0 0
    %1933 = vmatmul.mubr.bf16.gmra.mrb[0].mxu0 %v1658
    %v1934 = vpop.f32.mrb[0].mxu0
    %v1935 = vadd.f32 %v1838, %v1934
    %v1936 = vpop.f32.mrb[0].mxu0
    %v1937 = vpop.f32.mrb[0].mxu0
    %v1938 = vadd.f32 %v1841, %v1937
    %v1939 = vpop.f32.mrb[0].mxu0
    %1940 = vmatprep.mubr.bf16.mxu0 0
    %1941 = vmatmul.mubr.bf16.gmra.mrb[0].mxu0 %v1661
    %v1942 = vpop.f32.mrb[0].mxu0
    %v1943 = vadd.f32 %v1846, %v1942
    %v1944 = vpop.f32.mrb[0].mxu0
    %v1945 = vpop.f32.mrb[0].mxu0
    %v1946 = vadd.f32 %v1849, %v1945
    %v1947 = vpop.f32.mrb[0].mxu0
    %1948 = vmatprep.mubr.bf16.mxu0 0
    %1949 = vmatmul.mubr.bf16.gmra.mrb[0].mxu0 %v1664
    %v1950 = vpop.f32.mrb[0].mxu0
    %v1951 = vadd.f32 %v1854, %v1950
    %v1952 = vpop.f32.mrb[0].mxu0
    %v1953 = vpop.f32.mrb[0].mxu0
    %v1954 = vadd.f32 %v1857, %v1953
    %v1955 = vpop.f32.mrb[0].mxu0
    %1956 = vdwg.mxu0
    %v1957 = vadd.f32 %v1895, %v1898
    %v1958 = vadd.f32 %v1957, %v1903
    %v1959 = vadd.f32 %v1958, %v1906
    %v1960 = vadd.f32 %v1959, %v1911
    %v1961 = vadd.f32 %v1960, %v1914
    %v1962 = vadd.f32 %v1961, %v1919
    %v1963 = vadd.f32 %v1962, %v1922
    %v1964 = vadd.f32 %v1963, %v1927
    %v1965 = vadd.f32 %v1964, %v1930
    %v1966 = vadd.f32 %v1965, %v1935
    %v1967 = vadd.f32 %v1966, %v1938
    %v1968 = vadd.f32 %v1967, %v1943
    %v1969 = vadd.f32 %v1968, %v1946
    %v1970 = vadd.f32 %v1969, %v1951
    %v1971 = vadd.f32 %v1970, %v1954
    %v1972 = vrot.slane %v1971, 4
    %v1973 = vadd.f32 %v1971, %v1972
    %v1974 = vrot.slane %v1973, 2
    %v1975 = vadd.f32 %v1973, %v1974
    %v1976 = vrot.slane %v1975, 1
    %v1977 = vadd.f32 %v1975, %v1976
    %v1978 = vmul.f32 %v1977, 0.0078125
    %v1979 = vsub.f32 %v1895, %v1978
    %v1980 = vsub.f32 %v1898, %v1978
    %v1981 = vsub.f32 %v1903, %v1978
    %v1982 = vsub.f32 %v1906, %v1978
    %v1983 = vsub.f32 %v1911, %v1978
    %v1984 = vsub.f32 %v1914, %v1978
    %v1985 = vsub.f32 %v1919, %v1978
    %v1986 = vsub.f32 %v1922, %v1978
    %v1987 = vsub.f32 %v1927, %v1978
    %v1988 = vsub.f32 %v1930, %v1978
    %v1989 = vsub.f32 %v1935, %v1978
    %v1990 = vsub.f32 %v1938, %v1978
    %v1991 = vsub.f32 %v1943, %v1978
    %v1992 = vsub.f32 %v1946, %v1978
    %v1993 = vsub.f32 %v1951, %v1978
    %v1994 = vsub.f32 %v1954, %v1978
    %v1995 = vmul.f32 %v1979, %v1979
    %v1996 = vmul.f32 %v1980, %v1980
    %v1997 = vmul.f32 %v1981, %v1981
    %v1998 = vmul.f32 %v1982, %v1982
    %v1999 = vmul.f32 %v1983, %v1983
    %v2000 = vmul.f32 %v1984, %v1984
    %v2001 = vmul.f32 %v1985, %v1985
    %v2002 = vmul.f32 %v1986, %v1986
    %v2003 = vmul.f32 %v1987, %v1987
    %v2004 = vmul.f32 %v1988, %v1988
    %v2005 = vmul.f32 %v1989, %v1989
    %v2006 = vmul.f32 %v1990, %v1990
    %v2007 = vmul.f32 %v1991, %v1991
    %v2008 = vmul.f32 %v1992, %v1992
    %v2009 = vmul.f32 %v1993, %v1993
    %v2010 = vmul.f32 %v1994, %v1994
    %v2011 = vadd.f32 %v1995, %v1996
    %v2012 = vadd.f32 %v2011, %v1997
    %v2013 = vadd.f32 %v2012, %v1998
    %v2014 = vadd.f32 %v2013, %v1999
    %v2015 = vadd.f32 %v2014, %v2000
    %v2016 = vadd.f32 %v2015, %v2001
    %v2017 = vadd.f32 %v2016, %v2002
    %v2018 = vadd.f32 %v2017, %v2003
    %v2019 = vadd.f32 %v2018, %v2004
    %v2020 = vadd.f32 %v2019, %v2005
    %v2021 = vadd.f32 %v2020, %v2006
    %v2022 = vadd.f32 %v2021, %v2007
    %v2023 = vadd.f32 %v2022, %v2008
    %v2024 = vadd.f32 %v2023, %v2009
    %v2025 = vadd.f32 %v2024, %v2010
    %v2026 = vrot.slane %v2025, 4
    %v2027 = vadd.f32 %v2025, %v2026
    %v2028 = vrot.slane %v2027, 2
    %v2029 = vadd.f32 %v2027, %v2028
    %v2030 = vrot.slane %v2029, 1
    %v2031 = vadd.f32 %v2029, %v2030
    %v2032 = vmul.f32 %v2031, 0.0078125
    %v2033 = vadd.f32 %v2032, 1e-05
    %v2034 = vrsqrt.pop %v2033
    %v2035 = vld [vmem:[%s5] sm:$0x1]
    %v2036 = vmul.f32 %v2034, %v2035
    %v2037 = vlaneseq
    %v2038 = vshrl.u32 %v2037, 7
    %v2039 = vsub.s32 0, %v2038
    %v2040 = vrot.slane %v2036, %v2039
    %v2041 = vmul.f32 %v1979, %v2040
    %v2042 = vmul.f32 %v1980, %v2040
    %v2043 = vmul.f32 %v1981, %v2040
    %v2044 = vmul.f32 %v1982, %v2040
    %v2045 = vmul.f32 %v1983, %v2040
    %v2046 = vmul.f32 %v1984, %v2040
    %v2047 = vmul.f32 %v1985, %v2040
    %v2048 = vmul.f32 %v1986, %v2040
    %v2049 = vmul.f32 %v1987, %v2040
    %v2050 = vmul.f32 %v1988, %v2040
    %v2051 = vmul.f32 %v1989, %v2040
    %v2052 = vmul.f32 %v1990, %v2040
    %v2053 = vmul.f32 %v1991, %v2040
    %v2054 = vmul.f32 %v1992, %v2040
    %v2055 = vmul.f32 %v1993, %v2040
    %v2056 = vmul.f32 %v1994, %v2040
    %v2057 = vld [vmem:[%s6] sm:$0x1]
    %v2059 = vlaneseq
    %v2060 = vshrl.u32 %v2059, 7
    %v2061 = vsub.s32 0, %v2060
    %v2062 = vrot.slane %v2057, %v2061
    %v2064 = vadd.f32 %v2041, %v2062
    %v2065 = vadd.f32 %v2042, %v2062
    %v2066 = vadd.f32 %v2043, %v2062
    %v2067 = vadd.f32 %v2044, %v2062
    %v2068 = vadd.f32 %v2045, %v2062
    %v2069 = vadd.f32 %v2046, %v2062
    %v2070 = vadd.f32 %v2047, %v2062
    %v2071 = vadd.f32 %v2048, %v2062
    %v2072 = vadd.f32 %v2049, %v2062
    %v2073 = vadd.f32 %v2050, %v2062
    %v2074 = vadd.f32 %v2051, %v2062
    %v2075 = vadd.f32 %v2052, %v2062
    %v2076 = vadd.f32 %v2053, %v2062
    %v2077 = vadd.f32 %v2054, %v2062
    %v2078 = vadd.f32 %v2055, %v2062
    %v2079 = vadd.f32 %v2056, %v2062
    %v2080 = vmax.f32 %v2064, 0.0
    %v2081 = vmax.f32 %v2065, 0.0
    %v2082 = vmax.f32 %v2066, 0.0
    %v2083 = vmax.f32 %v2067, 0.0
    %v2084 = vmax.f32 %v2068, 0.0
    %v2085 = vmax.f32 %v2069, 0.0
    %v2086 = vmax.f32 %v2070, 0.0
    %v2087 = vmax.f32 %v2071, 0.0
    %v2088 = vmax.f32 %v2072, 0.0
    %v2089 = vmax.f32 %v2073, 0.0
    %v2090 = vmax.f32 %v2074, 0.0
    %v2091 = vmax.f32 %v2075, 0.0
    %v2092 = vmax.f32 %v2076, 0.0
    %v2093 = vmax.f32 %v2077, 0.0
    %v2094 = vmax.f32 %v2078, 0.0
    %v2095 = vmax.f32 %v2079, 0.0
    %v2096 = vpack.c.bf16 %v2081, %v2080
    %v2097 = vpack.c.bf16 %v2083, %v2082
    %v2098 = vpack.c.bf16 %v2085, %v2084
    %v2099 = vpack.c.bf16 %v2087, %v2086
    %v2100 = vpack.c.bf16 %v2089, %v2088
    %v2101 = vpack.c.bf16 %v2091, %v2090
    %v2102 = vpack.c.bf16 %v2093, %v2092
    %v2103 = vpack.c.bf16 %v2095, %v2094
    %v2112 = vunpack.c.l.b16 %v2096
    %v2113 = vunpack.c.h.b16 %v2096
    %v2114 = vunpack.c.l.b16 %v2097
    %v2115 = vunpack.c.h.b16 %v2097
    %v2116 = vunpack.c.l.b16 %v2098
    %v2117 = vunpack.c.h.b16 %v2098
    %v2118 = vunpack.c.l.b16 %v2099
    %v2119 = vunpack.c.h.b16 %v2099
    %v2120 = vunpack.c.l.b16 %v2100
    %v2121 = vunpack.c.h.b16 %v2100
    %v2122 = vunpack.c.l.b16 %v2101
    %v2123 = vunpack.c.h.b16 %v2101
    %v2124 = vunpack.c.l.b16 %v2102
    %v2125 = vunpack.c.h.b16 %v2102
    %v2126 = vunpack.c.l.b16 %v2103
    %v2127 = vunpack.c.h.b16 %v2103
    %v2128 = vpack.c.b16 %v2112, %v2112
    %v2129 = vpack.c.b16 %v2113, %v2113
    %v2130 = vpack.c.b16 %v2114, %v2114
    %v2131 = vpack.c.b16 %v2115, %v2115
    %v2132 = vpack.c.b16 %v2116, %v2116
    %v2133 = vpack.c.b16 %v2117, %v2117
    %v2134 = vpack.c.b16 %v2118, %v2118
    %v2135 = vpack.c.b16 %v2119, %v2119
    %v2136 = vpack.c.b16 %v2120, %v2120
    %v2137 = vpack.c.b16 %v2121, %v2121
    %v2138 = vpack.c.b16 %v2122, %v2122
    %v2139 = vpack.c.b16 %v2123, %v2123
    %v2140 = vpack.c.b16 %v2124, %v2124
    %v2141 = vpack.c.b16 %v2125, %v2125
    %v2142 = vpack.c.b16 %v2126, %v2126
    %v2143 = vpack.c.b16 %v2127, %v2127
    %2160 = vst [vmem:[#allocation2] sm:$0xf] %v2128
    %2161 = vst [vmem:[#allocation2 + $0x4] sm:$0xf] %v2129
    %2162 = vst [vmem:[#allocation2 + $0x8] sm:$0xf] %v2130
    %2163 = vst [vmem:[#allocation2 + $0xc] sm:$0xf] %v2131
    %2164 = vst [vmem:[#allocation2 + $0x10] sm:$0xf] %v2132
    %2165 = vst [vmem:[#allocation2 + $0x14] sm:$0xf] %v2133
    %2166 = vst [vmem:[#allocation2 + $0x18] sm:$0xf] %v2134
    %2167 = vst [vmem:[#allocation2 + $0x1c] sm:$0xf] %v2135
    %2168 = vst [vmem:[#allocation2 + $0x20] sm:$0xf] %v2136
    %2169 = vst [vmem:[#allocation2 + $0x24] sm:$0xf] %v2137
    %2170 = vst [vmem:[#allocation2 + $0x28] sm:$0xf] %v2138
    %2171 = vst [vmem:[#allocation2 + $0x2c] sm:$0xf] %v2139
    %2172 = vst [vmem:[#allocation2 + $0x30] sm:$0xf] %v2140
    %2173 = vst [vmem:[#allocation2 + $0x34] sm:$0xf] %v2141
    %2174 = vst [vmem:[#allocation2 + $0x38] sm:$0xf] %v2142
    %2175 = vst [vmem:[#allocation2 + $0x3c] sm:$0xf] %v2143
    // Predicated region
    $region30: #{tpu_custom_call.1} parent=1 // pred_check
      _
    $region31: #{tpu_custom_call.1} parent=1 // pred_check_branch
      %2177 = sbr.rel (0) target = $region33
    $region32: #{tpu_custom_call.1} parent=1 // pred_region
      %s2179 = ssub.s32 1024, 1024
      %2180 = vsyncadd [#allocation3], %s2179
      %s2181 = sshll.u32 [#allocation2], 4
      %s2182 = int_to_ptr.vmem [resolvable:$true] %s2181
      %2187 = dma.vmem_to_hbm [thread:$0]  %s2182, 1024, %s7, [#allocation3], 64, 64, 4
    $region33: #{tpu_custom_call.1} parent=1 // pred_fallthru
      _
    // Predicated region
    $region34: #{tpu_custom_call.1} parent=1 // pred_check
      _
    $region35: #{tpu_custom_call.1} parent=1 // pred_check_branch
      %2189 = sbr.rel (0) target = $region37
    $region36: #{tpu_custom_call.1} parent=1 // pred_region
      %2190 = dma.done [#allocation3], 1024
    $region37: #{tpu_custom_call.1} parent=1 // pred_fallthru
      _
    %2191 = vsyncpa [#allocation3], 1

</llo_original>
